<compile_context>
chip_gen: v5e
topology: v5e:2x2
jax: 0.10.0
libtpu: 0.0.40
codegen_flags: <defaults>
</compile_context>

<pallas_src>
import functools

import numpy as np
import jax
import jax.numpy as jnp
from jax.experimental import pallas as pl
from jax.experimental.pallas import tpu as pltpu


# ----------------------------- in-kernel helpers -----------------------------
def _silu(y):
    # SiLU in f32; the divide goes to the EUP via an approximate reciprocal.
    # exp argument clamped so exp(-y) cannot overflow to +inf for very negative y.
    e = jnp.exp(-jnp.maximum(y, -60.0))
    return y * pl.reciprocal(1.0 + e, approx=True)


def _mm(a, w16):
    # MXU matmul: bf16 operands, f32 accumulation.  `w16` is a bf16 weight slice.
    return jnp.dot(a.astype(jnp.bfloat16), w16, preferred_element_type=jnp.float32)


# ------------------------------- fused kernel --------------------------------
def _psa_kernel(x_ref, w_ref, b_ref, pesh_ref, o_ref, *,
                bs, N, channels, mid, num_heads, key_dim, head_dim):
    M = bs * N
    nhkd = num_heads * key_dim
    h_qkv = 2 * nhkd + mid

    # static row offsets into the packed bf16 weight slab
    r_c1 = 0
    r_qkv = r_c1 + channels
    r_pj = r_qkv + mid
    r_f1 = r_pj + mid
    r_f2 = r_f1 + mid
    r_c2 = r_f2 + 2 * mid

    x = x_ref[...].reshape(M, channels)                                   # (M, C) f32

    # --- conv_1 (1x1 + BN + SiLU): ONE lane-dense matmul, then lane-slice a / b ---
    ab = _silu(_mm(x, w_ref[r_c1:r_c1 + channels, :2 * mid]) + b_ref[0:1, :2 * mid])
    a = ab[:, :mid]                                                       # (M, mid)
    b = ab[:, mid:]                                                       # (M, mid)

    # --- qkv: ONE matmul + ONE bias add (scale already folded into the q columns) ---
    qkv = _mm(b, w_ref[r_qkv:r_qkv + mid, :h_qkv]) + b_ref[1:2, :h_qkv]   # (M, h)
    q16 = qkv[:, :nhkd].astype(jnp.bfloat16)
    k16 = qkv[:, nhkd:2 * nhkd].astype(jnp.bfloat16)
    v16 = qkv[:, 2 * nhkd:].astype(jnp.bfloat16)

    pew = b_ref[8:17, :mid].reshape(9, 1, mid)                            # (9, 1, mid)
    pesh = pesh_ref[...]                                                  # (9N, N) bf16

    # --- per-image MHSA + depthwise-3x3 positional encoding (all VMEM resident) ---
    attn_pe = []
    for i in range(bs):                                  # short static per-image loop
        lo = i * N
        qi, ki, vi = q16[lo:lo + N], k16[lo:lo + N], v16[lo:lo + N]
        heads = []
        for h in range(num_heads):                       # static unroll over heads
            qh = qi[:, h * key_dim:(h + 1) * key_dim]
            kh = ki[:, h * key_dim:(h + 1) * key_dim]
            vh = vi[:, h * head_dim:(h + 1) * head_dim]
            # scores = q @ k^T without materializing the transpose
            s = jax.lax.dot_general(qh, kh, (((1,), (1,)), ((), ())),
                                    preferred_element_type=jnp.float32)   # (N, N)
            s = s - jnp.max(s, axis=-1, keepdims=True)
            p = jnp.exp(s)
            p = p * pl.reciprocal(jnp.sum(p, axis=-1, keepdims=True), approx=True)
            heads.append(jnp.dot(p.astype(jnp.bfloat16), vh,
                                 preferred_element_type=jnp.float32))     # (N, hd)
        att = heads[0] if num_heads == 1 else jnp.concatenate(heads, axis=-1)

        # same-padded depthwise 3x3 on v: ONE (9N, N) @ (N, mid) matmul, then a single
        # tap-weighted reduction (one MXU push instead of nine, no per-tap broadcasts).
        sh = jnp.dot(pesh, vi, preferred_element_type=jnp.float32).reshape(9, N, mid)
        pe = jnp.sum(sh * pew, axis=0)                                    # (N, mid)
        attn_pe.append(att + pe)

    ap = attn_pe[0] if bs == 1 else jnp.concatenate(attn_pe, axis=0)      # (M, mid)

    # --- proj + residual (pe conv bias pre-folded into the proj bias) ---
    b = b + _mm(ap, w_ref[r_pj:r_pj + mid, :mid]) + b_ref[2:3, :mid]

    # --- FFN + residual ---
    f = _silu(_mm(b, w_ref[r_f1:r_f1 + mid, :2 * mid]) + b_ref[3:4, :2 * mid])
    b = b + _mm(f, w_ref[r_f2:r_f2 + 2 * mid, :mid]) + b_ref[4:5, :mid]

    # --- conv_2 on concat(a, b): ONE K = 2*mid matmul, single lane-dense store ---
    cat = jnp.concatenate([a, b], axis=-1)                                # (M, 2*mid)
    out = _silu(_mm(cat, w_ref[r_c2:r_c2 + 2 * mid, :channels]) + b_ref[5:6, :channels])
    o_ref[...] = out.reshape(bs, N, channels).astype(o_ref.dtype)


# --------------------------------- wrapper -----------------------------------
def _default_images_per_step(B):
    """Merged batch (one grid step) on single-TC chips; >=2 parallel steps on v7x."""
    try:
        kind = jax.devices()[0].device_kind.lower()
    except Exception:
        kind = ""
    if ("v7" in kind or "7x" in kind) and B >= 2:
        ips = max(1, B // 2)       # 2 grid steps -> one per TensorCore
    else:
        ips = B                    # single grid step, M = B*N rows per matmul
    if B % ips != 0:
        ips = 1
    return ips


def psa_forward(x_nchw, prep, *, channels, mid, num_heads, key_dim, head_dim,
                images_per_step=None):
    B, C, H, W = x_nchw.shape
    assert C == channels and num_heads * head_dim == mid
    N = H * W
    bs = images_per_step if images_per_step is not None else _default_images_per_step(B)
    assert B % bs == 0
    x = jnp.transpose(x_nchw, (0, 2, 3, 1)).reshape(B, N, C)     # channel-last (B, N, C)

    w_slab, b_slab, pesh = prep["w"], prep["b"], prep["pesh"]
    kernel = functools.partial(_psa_kernel, bs=bs, N=N, channels=channels, mid=mid,
                               num_heads=num_heads, key_dim=key_dim, head_dim=head_dim)
    out = pl.pallas_call(
        kernel,
        out_shape=jax.ShapeDtypeStruct((B, N, channels), x.dtype),
        grid=(B // bs,),
        in_specs=[pl.BlockSpec((bs, N, C), lambda g: (g, 0, 0)),
                  pl.BlockSpec(w_slab.shape, lambda g: (0, 0)),
                  pl.BlockSpec(b_slab.shape, lambda g: (0, 0)),
                  pl.BlockSpec(pesh.shape, lambda g: (0, 0))],
        out_specs=pl.BlockSpec((bs, N, channels), lambda g: (g, 0, 0)),
        compiler_params=pltpu.CompilerParams(
            dimension_semantics=("parallel",),     # batch steps -> both TCs on v7x
            vmem_limit_bytes=32 * 1024 * 1024,     # conservative (v7x has 64 MiB VMEM)
        ),
    )(x, w_slab, b_slab, pesh)
    return jnp.transpose(out.reshape(B, H, W, channels), (0, 3, 1, 2))    # back to NCHW


# -------------------------- one-time parameter prep ---------------------------
def _dw_shift_mats(H, W, dtype):
    """(9, N, N) 0/1 matrices: S[t] @ v picks, for each output pixel n, the input pixel
    at spatial offset (kh-1, kw-1) with t = kh*3 + kw, and zero outside the image.
    Same-padded depthwise 3x3 conv == sum_t (S[t] @ v) * w[t] (per-channel taps w)."""
    N = H * W
    h = np.arange(N) // W
    w = np.arange(N) % W
    mats = np.zeros((9, N, N), np.float32)
    for kh in range(3):
        for kw in range(3):
            dh, dw = kh - 1, kw - 1
            ok = (h + dh >= 0) & (h + dh < H) & (w + dw >= 0) & (w + dw < W)
            src = (h + dh) * W + (w + dw)
            rows = np.arange(N)[ok]
            mats[kh * 3 + kw, rows, src[ok]] = 1.0
    return jnp.asarray(mats, dtype=dtype)


def prepare_params(params, *, channels, mid, num_heads, key_dim, head_dim, H, W,
                   mm_dtype=jnp.bfloat16):
    """One-time conversion of PyTorch-layout parameters into the 3 kernel slabs:
    - bf16 matmul-weight slab: conv1 | qkv(q|k|v, scale folded into q) | proj | ffn1 |
      ffn2 | conv2, all transposed to (Cin, Cout) and zero-padded to a common width;
    - f32 bias slab: rows 0..5 = conv1/qkv/proj(+pe bias folded)/ffn1/ffn2/conv2
      biases, rows 8..16 = per-tap depthwise-3x3 weights;
    - bf16 flattened (9N, N) shift-matrix slab for the depthwise positional conv."""
    f32 = jnp.float32
    scale = float(key_dim) ** -0.5
    per = 2 * key_dim + head_dim
    nhkd = num_heads * key_dim
    h_qkv = mid + 2 * nhkd
    slab_w = max(channels, 2 * mid, h_qkv)

    def t(w_oi):                                  # (Cout, Cin) -> (Cin, Cout), f32
        return jnp.transpose(w_oi).astype(f32)

    def pad_cols(w):
        return jnp.pad(w, ((0, 0), (0, slab_w - w.shape[1])))

    def pad_row(v):
        v = jnp.asarray(v, f32).reshape(1, -1)
        return jnp.pad(v, ((0, 0), (0, slab_w - v.shape[1])))

    # conv_1 / proj / ffn / conv_2 (1x1 convs -> plain matmul weights)
    c1w = t(params["conv1_w"])                    # (channels, 2*mid)
    pjw = t(params["proj_w"])                     # (mid, mid)
    f1w = t(params["ffn1_w"])                     # (mid, 2*mid)
    f2w = t(params["ffn2_w"])                     # (2*mid, mid)
    c2w = t(params["conv2_w"])                    # (2*mid, channels)

    # qkv: per-head interleaved (q, k, v) rows -> contiguous q | k | v columns
    wqkv = params["qkv_w"].reshape(num_heads, per, mid)
    bqkv = params["qkv_b"].reshape(num_heads, per)
    wq = wqkv[:, :key_dim].reshape(nhkd, mid) * scale           # fold scale into q
    wk = wqkv[:, key_dim:2 * key_dim].reshape(nhkd, mid)
    wv = wqkv[:, 2 * key_dim:].reshape(num_heads * head_dim, mid)
    qkvw = jnp.transpose(jnp.concatenate([wq, wk, wv], axis=0)).astype(f32)  # (mid, h)
    qkvb = jnp.concatenate([bqkv[:, :key_dim].reshape(-1) * scale,
                            bqkv[:, key_dim:2 * key_dim].reshape(-1),
                            bqkv[:, 2 * key_dim:].reshape(-1)])

    w_slab = jnp.concatenate(
        [pad_cols(w) for w in (c1w, qkvw, pjw, f1w, f2w, c2w)], axis=0
    ).astype(mm_dtype)                            # (channels + 4*mid + 4*mid, slab_w)

    # fold the pe conv bias into the proj bias: (x + peb) @ Wp + bp = x@Wp + (peb@Wp+bp)
    pjb_folded = params["proj_b"].astype(f32) + params["pe_b"].astype(f32) @ pjw
    pew = params["pe_w"].reshape(mid, 9).T.astype(f32)          # (9, mid) taps

    b_slab = jnp.concatenate(
        [pad_row(params["conv1_b"]), pad_row(qkvb), pad_row(pjb_folded),
         pad_row(params["ffn1_b"]), pad_row(params["ffn2_b"]), pad_row(params["conv2_b"]),
         jnp.zeros((2, slab_w), f32),                          # pad to sublane-aligned
         jnp.pad(pew, ((0, 0), (0, slab_w - mid))),            # rows 8..16
         jnp.zeros((7, slab_w), f32)], axis=0)                 # (24, slab_w) f32

    pesh = _dw_shift_mats(H, W, mm_dtype).reshape(9 * H * W, H * W)
    return {"w": w_slab, "b": b_slab, "pesh": pesh}


def init_params(key, channels, mid, num_heads, key_dim, head_dim):
    """Synthetic PyTorch-layout parameters (conv weights (Cout, Cin), BN folded -> bias)."""
    h = mid + 2 * key_dim * num_heads
    ks = jax.random.split(key, 14)

    def w(k, shape):
        return 0.05 * jax.random.normal(k, shape, jnp.float32)

    return {
        "conv1_w": w(ks[0], (2 * mid, channels)), "conv1_b": w(ks[1], (2 * mid,)),
        "qkv_w":   w(ks[2], (h, mid)),            "qkv_b":   w(ks[3], (h,)),
        "pe_w":    w(ks[4], (mid, 1, 3, 3)),      "pe_b":    w(ks[5], (mid,)),
        "proj_w":  w(ks[6], (mid, mid)),          "proj_b":  w(ks[7], (mid,)),
        "ffn1_w":  w(ks[8], (2 * mid, mid)),      "ffn1_b":  w(ks[9], (2 * mid,)),
        "ffn2_w":  w(ks[10], (mid, 2 * mid)),     "ffn2_b":  w(ks[11], (mid,)),
        "conv2_w": w(ks[12], (channels, 2 * mid)), "conv2_b": w(ks[13], (channels,)),
    }


if __name__ == "__main__":
    # PSA(channels=128): mid = 64, num_heads = mid // 64 = 1, head_dim = 64, key_dim = 32
    channels = 128
    mid = int(channels * 0.5)
    num_heads = mid // 64
    assert num_heads >= 1, "PSA requires channels >= 128 (num_heads = mid // 64)"
    head_dim = mid // num_heads
    key_dim = int(head_dim * 0.5)

    B, H, W = 2, 8, 8
    key = jax.random.PRNGKey(0)
    kx, kp = jax.random.split(key)
    x = jax.random.normal(kx, (B, channels, H, W), jnp.float32)

    params = init_params(kp, channels, mid, num_heads, key_dim, head_dim)
    prep = prepare_params(params, channels=channels, mid=mid, num_heads=num_heads,
                          key_dim=key_dim, head_dim=head_dim, H=H, W=W)

    ips = _default_images_per_step(B)   # merged batch on v5e/v6e, 2 parallel steps on v7x
    fwd = jax.jit(functools.partial(psa_forward, channels=channels, mid=mid,
                                    num_heads=num_heads, key_dim=key_dim,
                                    head_dim=head_dim, images_per_step=ips))
    out = jax.block_until_ready(fwd(x, prep))
    assert out.shape == (B, channels, H, W) and out.dtype == jnp.float32
    assert bool(jnp.isfinite(out).all())
    print("KERNEL_OK")
</pallas_src>

<mosaic_0001>
module attributes {stable_mosaic.version = 11 : i64} {
  func.func @_psa_kernel(%arg0: i32, %arg1: memref<2x64x128xf32, #tpu.memory_space<vmem>>, %arg2: memref<576x128xbf16, #tpu.memory_space<vmem>>, %arg3: memref<24x128xf32, #tpu.memory_space<vmem>>, %arg4: memref<576x64xbf16, #tpu.memory_space<vmem>>, %arg5: memref<2x64x128xf32, #tpu.memory_space<vmem>>) attributes {dimension_semantics = [#tpu.dimension_semantics<parallel>], iteration_bounds = array<i64: 1>, scalar_prefetch = 0 : i64, scratch_operands = 0 : i64, tpu.core_type = #tpu.core_type<tc>, window_params = [{transform_indices = @transform_0, window_bounds = array<i64: 2, 64, 128>}, {pipeline_mode = #tpu.pipeline_mode<synchronous>, transform_indices = @transform_1, window_bounds = array<i64: 576, 128>}, {pipeline_mode = #tpu.pipeline_mode<synchronous>, transform_indices = @transform_2, window_bounds = array<i64: 24, 128>}, {pipeline_mode = #tpu.pipeline_mode<synchronous>, transform_indices = @transform_3, window_bounds = array<i64: 576, 64>}, {transform_indices = @transform_4, window_bounds = array<i64: 2, 64, 128>}]} {
    %c0 = arith.constant 0 : index
    %c0_0 = arith.constant 0 : index
    %c0_1 = arith.constant 0 : index
    %0 = vector.load %arg1[%c0, %c0_0, %c0_1] : memref<2x64x128xf32, #tpu.memory_space<vmem>>, vector<2x64x128xf32>
    %1 = vector.shape_cast %0 : vector<2x64x128xf32> to vector<128x128xf32>
    %c0_2 = arith.constant 0 : index
    %c0_3 = arith.constant 0 : index
    %2 = vector.load %arg2[%c0_2, %c0_3] : memref<576x128xbf16, #tpu.memory_space<vmem>>, vector<128x128xbf16>
    %3 = arith.truncf %1 : vector<128x128xf32> to vector<128x128xbf16>
    %cst = arith.constant dense<0.000000e+00> : vector<128x128xf32>
    %4 = tpu.matmul %3, %2, %cst {dimension_numbers = #tpu.dot_dimension_numbers<[1], [0], [0], [1], [0, 0, 1, 1], [], []>} : vector<128x128xbf16>, vector<128x128xbf16>, vector<128x128xf32> -> vector<128x128xf32>
    %c0_4 = arith.constant 0 : index
    %c0_5 = arith.constant 0 : index
    %5 = vector.load %arg3[%c0_4, %c0_5] : memref<24x128xf32, #tpu.memory_space<vmem>>, vector<1x128xf32>
    %6 = vector.broadcast %5 : vector<1x128xf32> to vector<128x128xf32>
    %7 = arith.addf %4, %6 : vector<128x128xf32>
    %cst_6 = arith.constant -6.000000e+01 : f32
    %8 = vector.broadcast %cst_6 : f32 to vector<128x128xf32>
    %9 = arith.maximumf %7, %8 : vector<128x128xf32>
    %cst_7 = arith.constant 0.000000e+00 : f32
    %10 = vector.broadcast %cst_7 : f32 to vector<128x128xf32>
    %11 = arith.subf %10, %9 : vector<128x128xf32>
    %12 = math.exp %11 : vector<128x128xf32>
    %cst_8 = arith.constant 1.000000e+00 : f32
    %13 = vector.broadcast %cst_8 : f32 to vector<128x128xf32>
    %14 = arith.addf %13, %12 : vector<128x128xf32>
    %15 = tpu.reciprocal %14 {approx = true} : vector<128x128xf32> -> vector<128x128xf32>
    %16 = arith.mulf %7, %15 : vector<128x128xf32>
    %17 = vector.extract_strided_slice %16 {offsets = [0, 0], sizes = [128, 64], strides = [1, 1]} : vector<128x128xf32> to vector<128x64xf32>
    %18 = vector.extract_strided_slice %16 {offsets = [0, 64], sizes = [128, 64], strides = [1, 1]} : vector<128x128xf32> to vector<128x64xf32>
    %c128 = arith.constant 128 : index
    %c0_9 = arith.constant 0 : index
    %19 = vector.load %arg2[%c128, %c0_9] : memref<576x128xbf16, #tpu.memory_space<vmem>>, vector<64x128xbf16>
    %20 = arith.truncf %18 : vector<128x64xf32> to vector<128x64xbf16>
    %cst_10 = arith.constant dense<0.000000e+00> : vector<128x128xf32>
    %21 = tpu.matmul %20, %19, %cst_10 {dimension_numbers = #tpu.dot_dimension_numbers<[1], [0], [0], [1], [0, 0, 1, 1], [], []>} : vector<128x64xbf16>, vector<64x128xbf16>, vector<128x128xf32> -> vector<128x128xf32>
    %c1 = arith.constant 1 : index
    %c0_11 = arith.constant 0 : index
    %22 = vector.load %arg3[%c1, %c0_11] : memref<24x128xf32, #tpu.memory_space<vmem>>, vector<1x128xf32>
    %23 = vector.broadcast %22 : vector<1x128xf32> to vector<128x128xf32>
    %24 = arith.addf %21, %23 : vector<128x128xf32>
    %25 = vector.extract_strided_slice %24 {offsets = [0, 0], sizes = [128, 32], strides = [1, 1]} : vector<128x128xf32> to vector<128x32xf32>
    %26 = arith.truncf %25 : vector<128x32xf32> to vector<128x32xbf16>
    %27 = vector.extract_strided_slice %24 {offsets = [0, 32], sizes = [128, 32], strides = [1, 1]} : vector<128x128xf32> to vector<128x32xf32>
    %28 = arith.truncf %27 : vector<128x32xf32> to vector<128x32xbf16>
    %29 = vector.extract_strided_slice %24 {offsets = [0, 64], sizes = [128, 64], strides = [1, 1]} : vector<128x128xf32> to vector<128x64xf32>
    %30 = arith.truncf %29 : vector<128x64xf32> to vector<128x64xbf16>
    %c8 = arith.constant 8 : index
    %c0_12 = arith.constant 0 : index
    %31 = vector.load %arg3[%c8, %c0_12] : memref<24x128xf32, #tpu.memory_space<vmem>>, vector<9x64xf32>
    %32 = vector.shape_cast %31 : vector<9x64xf32> to vector<9x1x64xf32>
    %c0_13 = arith.constant 0 : index
    %c0_14 = arith.constant 0 : index
    %33 = vector.load %arg4[%c0_13, %c0_14] : memref<576x64xbf16, #tpu.memory_space<vmem>>, vector<576x64xbf16>
    %34 = vector.extract_strided_slice %26 {offsets = [0, 0], sizes = [64, 32], strides = [1, 1]} : vector<128x32xbf16> to vector<64x32xbf16>
    %35 = vector.extract_strided_slice %28 {offsets = [0, 0], sizes = [64, 32], strides = [1, 1]} : vector<128x32xbf16> to vector<64x32xbf16>
    %36 = vector.extract_strided_slice %30 {offsets = [0, 0], sizes = [64, 64], strides = [1, 1]} : vector<128x64xbf16> to vector<64x64xbf16>
    %cst_15 = arith.constant dense<0.000000e+00> : vector<64x64xf32>
    %37 = tpu.matmul %34, %35, %cst_15 {dimension_numbers = #tpu.dot_dimension_numbers<[1], [1], [0], [0], [0, 0, 1, 0], [], []>} : vector<64x32xbf16>, vector<64x32xbf16>, vector<64x64xf32> -> vector<64x64xf32>
    %cst_16 = arith.constant dense<0xFF800000> : vector<64xf32>
    %38 = vector.multi_reduction <maximumf>, %37, %cst_16 [1] : vector<64x64xf32> to vector<64xf32>
    %39 = vector.shape_cast %38 : vector<64xf32> to vector<64x1xf32>
    %40 = vector.broadcast %39 : vector<64x1xf32> to vector<64x64xf32>
    %41 = arith.subf %37, %40 : vector<64x64xf32>
    %42 = math.exp %41 : vector<64x64xf32>
    %cst_17 = arith.constant dense<0.000000e+00> : vector<64xf32>
    %43 = vector.multi_reduction <add>, %42, %cst_17 [1] : vector<64x64xf32> to vector<64xf32>
    %44 = vector.shape_cast %43 : vector<64xf32> to vector<64x1xf32>
    %45 = tpu.reciprocal %44 {approx = true} : vector<64x1xf32> -> vector<64x1xf32>
    %46 = vector.broadcast %45 : vector<64x1xf32> to vector<64x64xf32>
    %47 = arith.mulf %42, %46 : vector<64x64xf32>
    %48 = arith.truncf %47 : vector<64x64xf32> to vector<64x64xbf16>
    %cst_18 = arith.constant dense<0.000000e+00> : vector<64x64xf32>
    %49 = tpu.matmul %48, %36, %cst_18 {dimension_numbers = #tpu.dot_dimension_numbers<[1], [0], [0], [1], [0, 0, 1, 1], [], []>} : vector<64x64xbf16>, vector<64x64xbf16>, vector<64x64xf32> -> vector<64x64xf32>
    %cst_19 = arith.constant dense<0.000000e+00> : vector<576x64xf32>
    %50 = tpu.matmul %33, %36, %cst_19 {dimension_numbers = #tpu.dot_dimension_numbers<[1], [0], [0], [1], [0, 0, 1, 1], [], []>} : vector<576x64xbf16>, vector<64x64xbf16>, vector<576x64xf32> -> vector<576x64xf32>
    %51 = vector.shape_cast %50 : vector<576x64xf32> to vector<9x64x64xf32>
    %52 = vector.broadcast %32 : vector<9x1x64xf32> to vector<9x64x64xf32>
    %53 = arith.mulf %51, %52 : vector<9x64x64xf32>
    %cst_20 = arith.constant dense<0.000000e+00> : vector<64x64xf32>
    %54 = vector.multi_reduction <add>, %53, %cst_20 [0] : vector<9x64x64xf32> to vector<64x64xf32>
    %55 = arith.addf %49, %54 : vector<64x64xf32>
    %56 = vector.extract_strided_slice %26 {offsets = [64, 0], sizes = [64, 32], strides = [1, 1]} : vector<128x32xbf16> to vector<64x32xbf16>
    %57 = vector.extract_strided_slice %28 {offsets = [64, 0], sizes = [64, 32], strides = [1, 1]} : vector<128x32xbf16> to vector<64x32xbf16>
    %58 = vector.extract_strided_slice %30 {offsets = [64, 0], sizes = [64, 64], strides = [1, 1]} : vector<128x64xbf16> to vector<64x64xbf16>
    %cst_21 = arith.constant dense<0.000000e+00> : vector<64x64xf32>
    %59 = tpu.matmul %56, %57, %cst_21 {dimension_numbers = #tpu.dot_dimension_numbers<[1], [1], [0], [0], [0, 0, 1, 0], [], []>} : vector<64x32xbf16>, vector<64x32xbf16>, vector<64x64xf32> -> vector<64x64xf32>
    %cst_22 = arith.constant dense<0xFF800000> : vector<64xf32>
    %60 = vector.multi_reduction <maximumf>, %59, %cst_22 [1] : vector<64x64xf32> to vector<64xf32>
    %61 = vector.shape_cast %60 : vector<64xf32> to vector<64x1xf32>
    %62 = vector.broadcast %61 : vector<64x1xf32> to vector<64x64xf32>
    %63 = arith.subf %59, %62 : vector<64x64xf32>
    %64 = math.exp %63 : vector<64x64xf32>
    %cst_23 = arith.constant dense<0.000000e+00> : vector<64xf32>
    %65 = vector.multi_reduction <add>, %64, %cst_23 [1] : vector<64x64xf32> to vector<64xf32>
    %66 = vector.shape_cast %65 : vector<64xf32> to vector<64x1xf32>
    %67 = tpu.reciprocal %66 {approx = true} : vector<64x1xf32> -> vector<64x1xf32>
    %68 = vector.broadcast %67 : vector<64x1xf32> to vector<64x64xf32>
    %69 = arith.mulf %64, %68 : vector<64x64xf32>
    %70 = arith.truncf %69 : vector<64x64xf32> to vector<64x64xbf16>
    %cst_24 = arith.constant dense<0.000000e+00> : vector<64x64xf32>
    %71 = tpu.matmul %70, %58, %cst_24 {dimension_numbers = #tpu.dot_dimension_numbers<[1], [0], [0], [1], [0, 0, 1, 1], [], []>} : vector<64x64xbf16>, vector<64x64xbf16>, vector<64x64xf32> -> vector<64x64xf32>
    %cst_25 = arith.constant dense<0.000000e+00> : vector<576x64xf32>
    %72 = tpu.matmul %33, %58, %cst_25 {dimension_numbers = #tpu.dot_dimension_numbers<[1], [0], [0], [1], [0, 0, 1, 1], [], []>} : vector<576x64xbf16>, vector<64x64xbf16>, vector<576x64xf32> -> vector<576x64xf32>
    %73 = vector.shape_cast %72 : vector<576x64xf32> to vector<9x64x64xf32>
    %74 = vector.broadcast %32 : vector<9x1x64xf32> to vector<9x64x64xf32>
    %75 = arith.mulf %73, %74 : vector<9x64x64xf32>
    %cst_26 = arith.constant dense<0.000000e+00> : vector<64x64xf32>
    %76 = vector.multi_reduction <add>, %75, %cst_26 [0] : vector<9x64x64xf32> to vector<64x64xf32>
    %77 = arith.addf %71, %76 : vector<64x64xf32>
    %78 = tpu.concatenate %55, %77 in 0 : vector<64x64xf32>, vector<64x64xf32> -> vector<128x64xf32>
    %c192 = arith.constant 192 : index
    %c0_27 = arith.constant 0 : index
    %79 = vector.load %arg2[%c192, %c0_27] : memref<576x128xbf16, #tpu.memory_space<vmem>>, vector<64x64xbf16>
    %80 = arith.truncf %78 : vector<128x64xf32> to vector<128x64xbf16>
    %cst_28 = arith.constant dense<0.000000e+00> : vector<128x64xf32>
    %81 = tpu.matmul %80, %79, %cst_28 {dimension_numbers = #tpu.dot_dimension_numbers<[1], [0], [0], [1], [0, 0, 1, 1], [], []>} : vector<128x64xbf16>, vector<64x64xbf16>, vector<128x64xf32> -> vector<128x64xf32>
    %82 = arith.addf %18, %81 : vector<128x64xf32>
    %c2 = arith.constant 2 : index
    %c0_29 = arith.constant 0 : index
    %83 = vector.load %arg3[%c2, %c0_29] : memref<24x128xf32, #tpu.memory_space<vmem>>, vector<1x64xf32>
    %84 = vector.broadcast %83 : vector<1x64xf32> to vector<128x64xf32>
    %85 = arith.addf %82, %84 : vector<128x64xf32>
    %c256 = arith.constant 256 : index
    %c0_30 = arith.constant 0 : index
    %86 = vector.load %arg2[%c256, %c0_30] : memref<576x128xbf16, #tpu.memory_space<vmem>>, vector<64x128xbf16>
    %87 = arith.truncf %85 : vector<128x64xf32> to vector<128x64xbf16>
    %cst_31 = arith.constant dense<0.000000e+00> : vector<128x128xf32>
    %88 = tpu.matmul %87, %86, %cst_31 {dimension_numbers = #tpu.dot_dimension_numbers<[1], [0], [0], [1], [0, 0, 1, 1], [], []>} : vector<128x64xbf16>, vector<64x128xbf16>, vector<128x128xf32> -> vector<128x128xf32>
    %c3 = arith.constant 3 : index
    %c0_32 = arith.constant 0 : index
    %89 = vector.load %arg3[%c3, %c0_32] : memref<24x128xf32, #tpu.memory_space<vmem>>, vector<1x128xf32>
    %90 = vector.broadcast %89 : vector<1x128xf32> to vector<128x128xf32>
    %91 = arith.addf %88, %90 : vector<128x128xf32>
    %cst_33 = arith.constant -6.000000e+01 : f32
    %92 = vector.broadcast %cst_33 : f32 to vector<128x128xf32>
    %93 = arith.maximumf %91, %92 : vector<128x128xf32>
    %cst_34 = arith.constant 0.000000e+00 : f32
    %94 = vector.broadcast %cst_34 : f32 to vector<128x128xf32>
    %95 = arith.subf %94, %93 : vector<128x128xf32>
    %96 = math.exp %95 : vector<128x128xf32>
    %cst_35 = arith.constant 1.000000e+00 : f32
    %97 = vector.broadcast %cst_35 : f32 to vector<128x128xf32>
    %98 = arith.addf %97, %96 : vector<128x128xf32>
    %99 = tpu.reciprocal %98 {approx = true} : vector<128x128xf32> -> vector<128x128xf32>
    %100 = arith.mulf %91, %99 : vector<128x128xf32>
    %c320 = arith.constant 320 : index
    %c0_36 = arith.constant 0 : index
    %101 = vector.load %arg2[%c320, %c0_36] : memref<576x128xbf16, #tpu.memory_space<vmem>>, vector<128x64xbf16>
    %102 = arith.truncf %100 : vector<128x128xf32> to vector<128x128xbf16>
    %cst_37 = arith.constant dense<0.000000e+00> : vector<128x64xf32>
    %103 = tpu.matmul %102, %101, %cst_37 {dimension_numbers = #tpu.dot_dimension_numbers<[1], [0], [0], [1], [0, 0, 1, 1], [], []>} : vector<128x128xbf16>, vector<128x64xbf16>, vector<128x64xf32> -> vector<128x64xf32>
    %104 = arith.addf %85, %103 : vector<128x64xf32>
    %c4 = arith.constant 4 : index
    %c0_38 = arith.constant 0 : index
    %105 = vector.load %arg3[%c4, %c0_38] : memref<24x128xf32, #tpu.memory_space<vmem>>, vector<1x64xf32>
    %106 = vector.broadcast %105 : vector<1x64xf32> to vector<128x64xf32>
    %107 = arith.addf %104, %106 : vector<128x64xf32>
    %108 = tpu.concatenate %17, %107 in 1 : vector<128x64xf32>, vector<128x64xf32> -> vector<128x128xf32>
    %c448 = arith.constant 448 : index
    %c0_39 = arith.constant 0 : index
    %109 = vector.load %arg2[%c448, %c0_39] : memref<576x128xbf16, #tpu.memory_space<vmem>>, vector<128x128xbf16>
    %110 = arith.truncf %108 : vector<128x128xf32> to vector<128x128xbf16>
    %cst_40 = arith.constant dense<0.000000e+00> : vector<128x128xf32>
    %111 = tpu.matmul %110, %109, %cst_40 {dimension_numbers = #tpu.dot_dimension_numbers<[1], [0], [0], [1], [0, 0, 1, 1], [], []>} : vector<128x128xbf16>, vector<128x128xbf16>, vector<128x128xf32> -> vector<128x128xf32>
    %c5 = arith.constant 5 : index
    %c0_41 = arith.constant 0 : index
    %112 = vector.load %arg3[%c5, %c0_41] : memref<24x128xf32, #tpu.memory_space<vmem>>, vector<1x128xf32>
    %113 = vector.broadcast %112 : vector<1x128xf32> to vector<128x128xf32>
    %114 = arith.addf %111, %113 : vector<128x128xf32>
    %cst_42 = arith.constant -6.000000e+01 : f32
    %115 = vector.broadcast %cst_42 : f32 to vector<128x128xf32>
    %116 = arith.maximumf %114, %115 : vector<128x128xf32>
    %cst_43 = arith.constant 0.000000e+00 : f32
    %117 = vector.broadcast %cst_43 : f32 to vector<128x128xf32>
    %118 = arith.subf %117, %116 : vector<128x128xf32>
    %119 = math.exp %118 : vector<128x128xf32>
    %cst_44 = arith.constant 1.000000e+00 : f32
    %120 = vector.broadcast %cst_44 : f32 to vector<128x128xf32>
    %121 = arith.addf %120, %119 : vector<128x128xf32>
    %122 = tpu.reciprocal %121 {approx = true} : vector<128x128xf32> -> vector<128x128xf32>
    %123 = arith.mulf %114, %122 : vector<128x128xf32>
    %124 = vector.shape_cast %123 : vector<128x128xf32> to vector<2x64x128xf32>
    %c0_45 = arith.constant 0 : index
    %c0_46 = arith.constant 0 : index
    %c0_47 = arith.constant 0 : index
    %125 = vector.load %arg5[%c0_45, %c0_46, %c0_47] : memref<2x64x128xf32, #tpu.memory_space<vmem>>, vector<2x64x128xf32>
    tpu.vector_store %arg5[%c0_45, %c0_46, %c0_47], %124 {strides = array<i32>} : memref<2x64x128xf32, #tpu.memory_space<vmem>>, vector<2x64x128xf32>,
    return
  }
  func.func @transform_0(%arg0: i32) -> (i32, i32, i32) {
    %c0_i32 = arith.constant 0 : i32
    %c0_i32_0 = arith.constant 0 : i32
    %c0_i32_1 = arith.constant 0 : i32
    return %arg0, %c0_i32, %c0_i32_0 : i32, i32, i32
  }
  func.func @transform_1(%arg0: i32) -> (i32, i32) {
    %c0_i32 = arith.constant 0 : i32
    %c0_i32_0 = arith.constant 0 : i32
    %c0_i32_1 = arith.constant 0 : i32
    return %c0_i32, %c0_i32_0 : i32, i32
  }
  func.func @transform_2(%arg0: i32) -> (i32, i32) {
    %c0_i32 = arith.constant 0 : i32
    %c0_i32_0 = arith.constant 0 : i32
    %c0_i32_1 = arith.constant 0 : i32
    return %c0_i32, %c0_i32_0 : i32, i32
  }
  func.func @transform_3(%arg0: i32) -> (i32, i32) {
    %c0_i32 = arith.constant 0 : i32
    %c0_i32_0 = arith.constant 0 : i32
    %c0_i32_1 = arith.constant 0 : i32
    return %c0_i32, %c0_i32_0 : i32, i32
  }
  func.func @transform_4(%arg0: i32) -> (i32, i32, i32) {
    %c0_i32 = arith.constant 0 : i32
    %c0_i32_0 = arith.constant 0 : i32
    %c0_i32_1 = arith.constant 0 : i32
    return %arg0, %c0_i32, %c0_i32_0 : i32, i32, i32
  }
}

</mosaic_0001>

<llo_original>
// kernel: psa_forward.1
$region0: #{psa_forward.1}
  #allocation0 [shape = 'u32[]', space=smem, size = 0x4, offset = 0x4, fixed_abs, tag = 'smem constant byte address 0x4 - core index']
  #allocation1 [shape = 'u32[72,128]{1,0:T(1,128)}', space=vmem, size = 0x9000, scoped, tag = 'internal scratch']
  %s0 = inlined_call_operand.vmem [shape: f32[2,64,128], index: 0, kind: input, shape index: {}]
  %s1 = inlined_call_operand.vmem [shape: bf16[576,128], index: 1, kind: input, shape index: {}]
  %s2 = inlined_call_operand.vmem [shape: f32[24,128], index: 2, kind: input, shape index: {}]
  %s3 = inlined_call_operand.vmem [shape: bf16[576,64], index: 3, kind: input, shape index: {}]
  %s4 = inlined_call_operand.hbm [shape: f32[2,64,128], index: 4, kind: output, shape index: {}]
  %s5 = sld [smem:[#allocation0]]
  $region26: #{psa_forward.1} parent=0
    _
  %s7 = ssub.s32 1, %s5
  %s8 = scalar_select 0, %s7, %s5
  $region1: #{psa_forward.1} parent=0
    #allocation2 [shape = 'u8[65536]{0}', space=vmem, size = 0x10000, scoped, tag = 'output window, operand 0, single buffered']
    #allocation3 [shape = 's32[1]{0}', space=sflag, size = 0x4, scoped, tag = 'scoped memory for psa_forward.1']
    %9 = vsyncpa [#allocation3], 0
    // Predicated region
    $region2: #{psa_forward.1} parent=1 // pred_check
      _
    $region3: #{psa_forward.1} parent=1 // pred_check_branch
      %11 = sbr.rel (0) target = $region5
    $region4: #{psa_forward.1} parent=1 // pred_region
      _
    $region5: #{psa_forward.1} parent=1 // pred_fallthru
      _
    // Predicated region
    $region6: #{psa_forward.1} parent=1 // pred_check
      _
    $region7: #{psa_forward.1} parent=1 // pred_check_branch
      %13 = sbr.rel (0) target = $region9
    $region8: #{psa_forward.1} parent=1 // pred_region
      _
    $region9: #{psa_forward.1} parent=1 // pred_fallthru
      _
    // Predicated region
    $region10: #{psa_forward.1} parent=1 // pred_check
      _
    $region11: #{psa_forward.1} parent=1 // pred_check_branch
      %15 = sbr.rel (0) target = $region13
    $region12: #{psa_forward.1} parent=1 // pred_region
      _
    $region13: #{psa_forward.1} parent=1 // pred_fallthru
      _
    // Predicated region
    $region14: #{psa_forward.1} parent=1 // pred_check
      _
    $region15: #{psa_forward.1} parent=1 // pred_check_branch
      %17 = sbr.rel (0) target = $region17
    $region16: #{psa_forward.1} parent=1 // pred_region
      _
    $region17: #{psa_forward.1} parent=1 // pred_fallthru
      _
    %v19 = vld [vmem:[%s0] sm:$0xff]
    %v20 = vld [vmem:[%s0 + $0x8] sm:$0xff]
    %v21 = vld [vmem:[%s0 + $0x10] sm:$0xff]
    %v22 = vld [vmem:[%s0 + $0x18] sm:$0xff]
    %v23 = vld [vmem:[%s0 + $0x20] sm:$0xff]
    %v24 = vld [vmem:[%s0 + $0x28] sm:$0xff]
    %v25 = vld [vmem:[%s0 + $0x30] sm:$0xff]
    %v26 = vld [vmem:[%s0 + $0x38] sm:$0xff]
    %v27 = vld [vmem:[%s0 + $0x40] sm:$0xff]
    %v28 = vld [vmem:[%s0 + $0x48] sm:$0xff]
    %v29 = vld [vmem:[%s0 + $0x50] sm:$0xff]
    %v30 = vld [vmem:[%s0 + $0x58] sm:$0xff]
    %v31 = vld [vmem:[%s0 + $0x60] sm:$0xff]
    %v32 = vld [vmem:[%s0 + $0x68] sm:$0xff]
    %v33 = vld [vmem:[%s0 + $0x70] sm:$0xff]
    %v34 = vld [vmem:[%s0 + $0x78] sm:$0xff]
    %v35 = vld [vmem:[%s1] sm:$0xf]
    %v36 = vld [vmem:[%s1 + $0x4] sm:$0xf]
    %v37 = vld [vmem:[%s1 + $0x8] sm:$0xf]
    %v38 = vld [vmem:[%s1 + $0xc] sm:$0xf]
    %v39 = vld [vmem:[%s1 + $0x10] sm:$0xf]
    %v40 = vld [vmem:[%s1 + $0x14] sm:$0xf]
    %v41 = vld [vmem:[%s1 + $0x18] sm:$0xf]
    %v42 = vld [vmem:[%s1 + $0x1c] sm:$0xf]
    %v43 = vld [vmem:[%s1 + $0x20] sm:$0xf]
    %v44 = vld [vmem:[%s1 + $0x24] sm:$0xf]
    %v45 = vld [vmem:[%s1 + $0x28] sm:$0xf]
    %v46 = vld [vmem:[%s1 + $0x2c] sm:$0xf]
    %v47 = vld [vmem:[%s1 + $0x30] sm:$0xf]
    %v48 = vld [vmem:[%s1 + $0x34] sm:$0xf]
    %v49 = vld [vmem:[%s1 + $0x38] sm:$0xf]
    %v50 = vld [vmem:[%s1 + $0x3c] sm:$0xf]
    %v51 = vpack.c.bf16 %v20, %v19
    %v52 = vpack.c.bf16 %v22, %v21
    %v53 = vpack.c.bf16 %v24, %v23
    %v54 = vpack.c.bf16 %v26, %v25
    %v55 = vpack.c.bf16 %v28, %v27
    %v56 = vpack.c.bf16 %v30, %v29
    %v57 = vpack.c.bf16 %v32, %v31
    %v58 = vpack.c.bf16 %v34, %v33
    %v59 = vld [vmem:[%s2] sm:$0x1]
    %v60 = vperm.slane %v59, 0
    %v77 = vunpack.c.l.b16 %v35
    %v78 = vunpack.c.l.b16 %v36
    %v79 = vunpack.c.l.b16 %v37
    %v80 = vunpack.c.l.b16 %v38
    %v81 = vunpack.c.l.b16 %v39
    %v82 = vunpack.c.l.b16 %v40
    %v83 = vunpack.c.l.b16 %v41
    %v84 = vunpack.c.l.b16 %v42
    %v85 = vunpack.c.l.b16 %v43
    %v86 = vunpack.c.l.b16 %v44
    %v87 = vunpack.c.l.b16 %v45
    %v88 = vunpack.c.l.b16 %v46
    %v89 = vunpack.c.l.b16 %v47
    %v90 = vunpack.c.l.b16 %v48
    %v91 = vunpack.c.l.b16 %v49
    %v92 = vunpack.c.l.b16 %v50
    %v93 = vpack.c.b16 %v78, %v77
    %v94 = vpack.c.b16 %v80, %v79
    %v95 = vpack.c.b16 %v82, %v81
    %v96 = vpack.c.b16 %v84, %v83
    %v97 = vpack.c.b16 %v86, %v85
    %v98 = vpack.c.b16 %v88, %v87
    %v99 = vpack.c.b16 %v90, %v89
    %v100 = vpack.c.b16 %v92, %v91
    %109 = vmatpush.bf16.msra.mxu0 %v100
    %110 = vmatpush.bf16.msra.mxu0 %v99
    %111 = vmatpush.bf16.msra.mxu0 %v98
    %112 = vmatpush.bf16.msra.mxu0 %v97
    %113 = vmatpush.bf16.msra.mxu0 %v96
    %114 = vmatpush.bf16.msra.mxu0 %v95
    %115 = vmatpush.bf16.msra.mxu0 %v94
    %116 = vmatpush.bf16.msra.mxu0 %v93
    %117 = vmatmul.bf16.gmra.mxu0 %v51
    %v118 = vpop.f32.mrf.mxu0
    %v119 = vadd.f32 %v60, %v118
    %v120 = vpop.f32.mrf.mxu0
    %v121 = vadd.f32 %v60, %v120
    %122 = vmatmul.bf16.gmra.mxu0 %v52
    %v123 = vpop.f32.mrf.mxu0
    %v124 = vadd.f32 %v60, %v123
    %v125 = vpop.f32.mrf.mxu0
    %v126 = vadd.f32 %v60, %v125
    %127 = vmatmul.bf16.gmra.mxu0 %v53
    %v128 = vpop.f32.mrf.mxu0
    %v129 = vadd.f32 %v60, %v128
    %v130 = vpop.f32.mrf.mxu0
    %v131 = vadd.f32 %v60, %v130
    %132 = vmatmul.bf16.gmra.mxu0 %v54
    %v133 = vpop.f32.mrf.mxu0
    %v134 = vadd.f32 %v60, %v133
    %v135 = vpop.f32.mrf.mxu0
    %v136 = vadd.f32 %v60, %v135
    %137 = vmatmul.bf16.gmra.mxu0 %v55
    %v138 = vpop.f32.mrf.mxu0
    %v139 = vadd.f32 %v60, %v138
    %v140 = vpop.f32.mrf.mxu0
    %v141 = vadd.f32 %v60, %v140
    %142 = vmatmul.bf16.gmra.mxu0 %v56
    %v143 = vpop.f32.mrf.mxu0
    %v144 = vadd.f32 %v60, %v143
    %v145 = vpop.f32.mrf.mxu0
    %v146 = vadd.f32 %v60, %v145
    %147 = vmatmul.bf16.gmra.mxu0 %v57
    %v148 = vpop.f32.mrf.mxu0
    %v149 = vadd.f32 %v60, %v148
    %v150 = vpop.f32.mrf.mxu0
    %v151 = vadd.f32 %v60, %v150
    %152 = vmatmul.bf16.gmra.mxu0 %v58
    %v153 = vpop.f32.mrf.mxu0
    %v154 = vadd.f32 %v60, %v153
    %v155 = vpop.f32.mrf.mxu0
    %v156 = vadd.f32 %v60, %v155
    %157 = vdwg.mxu0
    %v158 = vmax.f32 %v119, -60.0
    %v159 = vmax.f32 %v121, -60.0
    %v160 = vmax.f32 %v124, -60.0
    %v161 = vmax.f32 %v126, -60.0
    %v162 = vmax.f32 %v129, -60.0
    %v163 = vmax.f32 %v131, -60.0
    %v164 = vmax.f32 %v134, -60.0
    %v165 = vmax.f32 %v136, -60.0
    %v166 = vmax.f32 %v139, -60.0
    %v167 = vmax.f32 %v141, -60.0
    %v168 = vmax.f32 %v144, -60.0
    %v169 = vmax.f32 %v146, -60.0
    %v170 = vmax.f32 %v149, -60.0
    %v171 = vmax.f32 %v151, -60.0
    %v172 = vmax.f32 %v154, -60.0
    %v173 = vmax.f32 %v156, -60.0
    %v174 = vsub.f32 0.0, %v158
    %v175 = vsub.f32 0.0, %v159
    %v176 = vsub.f32 0.0, %v160
    %v177 = vsub.f32 0.0, %v161
    %v178 = vsub.f32 0.0, %v162
    %v179 = vsub.f32 0.0, %v163
    %v180 = vsub.f32 0.0, %v164
    %v181 = vsub.f32 0.0, %v165
    %v182 = vsub.f32 0.0, %v166
    %v183 = vsub.f32 0.0, %v167
    %v184 = vsub.f32 0.0, %v168
    %v185 = vsub.f32 0.0, %v169
    %v186 = vsub.f32 0.0, %v170
    %v187 = vsub.f32 0.0, %v171
    %v188 = vsub.f32 0.0, %v172
    %v189 = vsub.f32 0.0, %v173
    %v190 = vmul.f32 %v174, 1.442695
    %v191 = vpow.pop %v190
    %v192 = vmul.f32 %v175, 1.442695
    %v193 = vpow.pop %v192
    %v194 = vmul.f32 %v176, 1.442695
    %v195 = vpow.pop %v194
    %v196 = vmul.f32 %v177, 1.442695
    %v197 = vpow.pop %v196
    %v198 = vmul.f32 %v178, 1.442695
    %v199 = vpow.pop %v198
    %v200 = vmul.f32 %v179, 1.442695
    %v201 = vpow.pop %v200
    %v202 = vmul.f32 %v180, 1.442695
    %v203 = vpow.pop %v202
    %v204 = vmul.f32 %v181, 1.442695
    %v205 = vpow.pop %v204
    %v206 = vmul.f32 %v182, 1.442695
    %v207 = vpow.pop %v206
    %v208 = vmul.f32 %v183, 1.442695
    %v209 = vpow.pop %v208
    %v210 = vmul.f32 %v184, 1.442695
    %v211 = vpow.pop %v210
    %v212 = vmul.f32 %v185, 1.442695
    %v213 = vpow.pop %v212
    %v214 = vmul.f32 %v186, 1.442695
    %v215 = vpow.pop %v214
    %v216 = vmul.f32 %v187, 1.442695
    %v217 = vpow.pop %v216
    %v218 = vmul.f32 %v188, 1.442695
    %v219 = vpow.pop %v218
    %v220 = vmul.f32 %v189, 1.442695
    %v221 = vpow.pop %v220
    %v222 = vadd.f32 %v191, 1.0
    %v223 = vadd.f32 %v193, 1.0
    %v224 = vadd.f32 %v195, 1.0
    %v225 = vadd.f32 %v197, 1.0
    %v226 = vadd.f32 %v199, 1.0
    %v227 = vadd.f32 %v201, 1.0
    %v228 = vadd.f32 %v203, 1.0
    %v229 = vadd.f32 %v205, 1.0
    %v230 = vadd.f32 %v207, 1.0
    %v231 = vadd.f32 %v209, 1.0
    %v232 = vadd.f32 %v211, 1.0
    %v233 = vadd.f32 %v213, 1.0
    %v234 = vadd.f32 %v215, 1.0
    %v235 = vadd.f32 %v217, 1.0
    %v236 = vadd.f32 %v219, 1.0
    %v237 = vadd.f32 %v221, 1.0
    %v238 = vrcp.pop %v222
    %v239 = vrcp.pop %v223
    %v240 = vrcp.pop %v224
    %v241 = vrcp.pop %v225
    %v242 = vrcp.pop %v226
    %v243 = vrcp.pop %v227
    %v244 = vrcp.pop %v228
    %v245 = vrcp.pop %v229
    %v246 = vrcp.pop %v230
    %v247 = vrcp.pop %v231
    %v248 = vrcp.pop %v232
    %v249 = vrcp.pop %v233
    %v250 = vrcp.pop %v234
    %v251 = vrcp.pop %v235
    %v252 = vrcp.pop %v236
    %v253 = vrcp.pop %v237
    %v254 = vmul.f32 %v119, %v238
    %v255 = vmul.f32 %v121, %v239
    %v256 = vmul.f32 %v124, %v240
    %v257 = vmul.f32 %v126, %v241
    %v258 = vmul.f32 %v129, %v242
    %v259 = vmul.f32 %v131, %v243
    %v260 = vmul.f32 %v134, %v244
    %v261 = vmul.f32 %v136, %v245
    %v262 = vmul.f32 %v139, %v246
    %v263 = vmul.f32 %v141, %v247
    %v264 = vmul.f32 %v144, %v248
    %v265 = vmul.f32 %v146, %v249
    %v266 = vmul.f32 %v149, %v250
    %v267 = vmul.f32 %v151, %v251
    %v268 = vmul.f32 %v154, %v252
    %v269 = vmul.f32 %v156, %v253
    %v270 = vld [vmem:[%s1 + $0x40] sm:$0xf]
    %v271 = vld [vmem:[%s1 + $0x44] sm:$0xf]
    %v272 = vld [vmem:[%s1 + $0x48] sm:$0xf]
    %v273 = vld [vmem:[%s1 + $0x4c] sm:$0xf]
    %v274 = vld [vmem:[%s1 + $0x50] sm:$0xf]
    %v275 = vld [vmem:[%s1 + $0x54] sm:$0xf]
    %v276 = vld [vmem:[%s1 + $0x58] sm:$0xf]
    %v277 = vld [vmem:[%s1 + $0x5c] sm:$0xf]
    %v278 = vpack.c.bf16 %v255, %v254
    %v279 = vpack.c.bf16 %v257, %v256
    %v280 = vpack.c.bf16 %v259, %v258
    %v281 = vpack.c.bf16 %v261, %v260
    %v282 = vpack.c.bf16 %v263, %v262
    %v283 = vpack.c.bf16 %v265, %v264
    %v284 = vpack.c.bf16 %v267, %v266
    %v285 = vpack.c.bf16 %v269, %v268
    %v286 = vld [vmem:[%s2 + $0x1] sm:$0x1]
    %v287 = vperm.slane %v286, 0
    %296 = vrot.lane.b32.xlu0 %v278, 64
    %v297 = vpop.permute.xlu0 %296
    %298 = vrot.lane.b32.xlu0 %v279, 64
    %v299 = vpop.permute.xlu0 %298
    %300 = vrot.lane.b32.xlu0 %v280, 64
    %v301 = vpop.permute.xlu0 %300
    %302 = vrot.lane.b32.xlu0 %v281, 64
    %v303 = vpop.permute.xlu0 %302
    %304 = vrot.lane.b32.xlu0 %v282, 64
    %v305 = vpop.permute.xlu0 %304
    %306 = vrot.lane.b32.xlu0 %v283, 64
    %v307 = vpop.permute.xlu0 %306
    %308 = vrot.lane.b32.xlu0 %v284, 64
    %v309 = vpop.permute.xlu0 %308
    %310 = vrot.lane.b32.xlu0 %v285, 64
    %v311 = vpop.permute.xlu0 %310
    %v320 = vunpack.c.l.b16 %v270
    %v321 = vunpack.c.l.b16 %v271
    %v322 = vunpack.c.l.b16 %v272
    %v323 = vunpack.c.l.b16 %v273
    %v324 = vunpack.c.l.b16 %v274
    %v325 = vunpack.c.l.b16 %v275
    %v326 = vunpack.c.l.b16 %v276
    %v327 = vunpack.c.l.b16 %v277
    %v328 = vpack.c.b16 %v321, %v320
    %v329 = vpack.c.b16 %v323, %v322
    %v330 = vpack.c.b16 %v325, %v324
    %v331 = vpack.c.b16 %v327, %v326
    %vm336 = vcmask 523264
    %v338 = vsel %vm336, %v297, 0
    %v341 = vsel %vm336, %v299, 0
    %v344 = vsel %vm336, %v301, 0
    %v347 = vsel %vm336, %v303, 0
    %v350 = vsel %vm336, %v305, 0
    %v353 = vsel %vm336, %v307, 0
    %v356 = vsel %vm336, %v309, 0
    %v359 = vsel %vm336, %v311, 0
    %361 = vmatpush.bf16.msra.mxu0 0
    %362 = vmatpush.bf16.msra.mxu0 0
    %363 = vmatpush.bf16.msra.mxu0 0
    %364 = vmatpush.bf16.msra.mxu0 0
    %365 = vmatpush.bf16.msra.mxu0 %v331
    %366 = vmatpush.bf16.msra.mxu0 %v330
    %367 = vmatpush.bf16.msra.mxu0 %v329
    %368 = vmatpush.bf16.msra.mxu0 %v328
    %369 = vmatmul.bf16.gmra.mxu0 %v338
    %v370 = vpop.f32.mrf.mxu0
    %v371 = vadd.f32 %v287, %v370
    %v372 = vpop.f32.mrf.mxu0
    %v373 = vadd.f32 %v287, %v372
    %374 = vmatmul.bf16.gmra.mxu0 %v341
    %v375 = vpop.f32.mrf.mxu0
    %v376 = vadd.f32 %v287, %v375
    %v377 = vpop.f32.mrf.mxu0
    %v378 = vadd.f32 %v287, %v377
    %379 = vmatmul.bf16.gmra.mxu0 %v344
    %v380 = vpop.f32.mrf.mxu0
    %v381 = vadd.f32 %v287, %v380
    %v382 = vpop.f32.mrf.mxu0
    %v383 = vadd.f32 %v287, %v382
    %384 = vmatmul.bf16.gmra.mxu0 %v347
    %v385 = vpop.f32.mrf.mxu0
    %v386 = vadd.f32 %v287, %v385
    %v387 = vpop.f32.mrf.mxu0
    %v388 = vadd.f32 %v287, %v387
    %389 = vmatmul.bf16.gmra.mxu0 %v350
    %v390 = vpop.f32.mrf.mxu0
    %v391 = vadd.f32 %v287, %v390
    %v392 = vpop.f32.mrf.mxu0
    %v393 = vadd.f32 %v287, %v392
    %394 = vmatmul.bf16.gmra.mxu0 %v353
    %v395 = vpop.f32.mrf.mxu0
    %v396 = vadd.f32 %v287, %v395
    %v397 = vpop.f32.mrf.mxu0
    %v398 = vadd.f32 %v287, %v397
    %399 = vmatmul.bf16.gmra.mxu0 %v356
    %v400 = vpop.f32.mrf.mxu0
    %v401 = vadd.f32 %v287, %v400
    %v402 = vpop.f32.mrf.mxu0
    %v403 = vadd.f32 %v287, %v402
    %404 = vmatmul.bf16.gmra.mxu0 %v359
    %v405 = vpop.f32.mrf.mxu0
    %v406 = vadd.f32 %v287, %v405
    %v407 = vpop.f32.mrf.mxu0
    %v408 = vadd.f32 %v287, %v407
    %409 = vdwg.mxu0
    %v410 = vpack.c.bf16 %v371, %v371
    %v411 = vpack.c.bf16 %v373, %v373
    %v412 = vpack.c.bf16 %v376, %v376
    %v413 = vpack.c.bf16 %v378, %v378
    %v414 = vpack.c.bf16 %v381, %v381
    %v415 = vpack.c.bf16 %v383, %v383
    %v416 = vpack.c.bf16 %v386, %v386
    %v417 = vpack.c.bf16 %v388, %v388
    %v418 = vpack.c.bf16 %v391, %v391
    %v419 = vpack.c.bf16 %v393, %v393
    %v420 = vpack.c.bf16 %v396, %v396
    %v421 = vpack.c.bf16 %v398, %v398
    %v422 = vpack.c.bf16 %v401, %v401
    %v423 = vpack.c.bf16 %v403, %v403
    %v424 = vpack.c.bf16 %v406, %v406
    %v425 = vpack.c.bf16 %v408, %v408
    %v426 = vld [vmem:[%s2 + $0x8] sm:$0xff]
    %v427 = vld [vmem:[%s2 + $0x10] sm:$0x1]
    %v430 = vrot.slane %v426, 1
    %v431 = vrot.slane %v426, 2
    %v432 = vrot.slane %v426, 3
    %v433 = vrot.slane %v426, 4
    %v434 = vrot.slane %v426, 5
    %v435 = vrot.slane %v426, 6
    %v436 = vrot.slane %v426, 7
    %v437 = vld [vmem:[%s3] sm:$0xf]
    %v438 = vld [vmem:[%s3 + $0x4] sm:$0xf]
    %v439 = vld [vmem:[%s3 + $0x8] sm:$0xf]
    %v440 = vld [vmem:[%s3 + $0xc] sm:$0xf]
    %v441 = vld [vmem:[%s3 + $0x10] sm:$0xf]
    %v442 = vld [vmem:[%s3 + $0x14] sm:$0xf]
    %v443 = vld [vmem:[%s3 + $0x18] sm:$0xf]
    %v444 = vld [vmem:[%s3 + $0x1c] sm:$0xf]
    %v445 = vld [vmem:[%s3 + $0x20] sm:$0xf]
    %v446 = vld [vmem:[%s3 + $0x24] sm:$0xf]
    %v447 = vld [vmem:[%s3 + $0x28] sm:$0xf]
    %v448 = vld [vmem:[%s3 + $0x2c] sm:$0xf]
    %v449 = vld [vmem:[%s3 + $0x30] sm:$0xf]
    %v450 = vld [vmem:[%s3 + $0x34] sm:$0xf]
    %v451 = vld [vmem:[%s3 + $0x38] sm:$0xf]
    %v452 = vld [vmem:[%s3 + $0x3c] sm:$0xf]
    %v453 = vld [vmem:[%s3 + $0x40] sm:$0xf]
    %v454 = vld [vmem:[%s3 + $0x44] sm:$0xf]
    %v455 = vld [vmem:[%s3 + $0x48] sm:$0xf]
    %v456 = vld [vmem:[%s3 + $0x4c] sm:$0xf]
    %v457 = vld [vmem:[%s3 + $0x50] sm:$0xf]
    %v458 = vld [vmem:[%s3 + $0x54] sm:$0xf]
    %v459 = vld [vmem:[%s3 + $0x58] sm:$0xf]
    %v460 = vld [vmem:[%s3 + $0x5c] sm:$0xf]
    %v461 = vld [vmem:[%s3 + $0x60] sm:$0xf]
    %v462 = vld [vmem:[%s3 + $0x64] sm:$0xf]
    %v463 = vld [vmem:[%s3 + $0x68] sm:$0xf]
    %v464 = vld [vmem:[%s3 + $0x6c] sm:$0xf]
    %v465 = vld [vmem:[%s3 + $0x70] sm:$0xf]
    %v466 = vld [vmem:[%s3 + $0x74] sm:$0xf]
    %v467 = vld [vmem:[%s3 + $0x78] sm:$0xf]
    %v468 = vld [vmem:[%s3 + $0x7c] sm:$0xf]
    %v469 = vld [vmem:[%s3 + $0x80] sm:$0xf]
    %v470 = vld [vmem:[%s3 + $0x84] sm:$0xf]
    %v471 = vld [vmem:[%s3 + $0x88] sm:$0xf]
    %v472 = vld [vmem:[%s3 + $0x8c] sm:$0xf]
    %v473 = vld [vmem:[%s3 + $0x90] sm:$0xf]
    %v474 = vld [vmem:[%s3 + $0x94] sm:$0xf]
    %v475 = vld [vmem:[%s3 + $0x98] sm:$0xf]
    %v476 = vld [vmem:[%s3 + $0x9c] sm:$0xf]
    %v477 = vld [vmem:[%s3 + $0xa0] sm:$0xf]
    %v478 = vld [vmem:[%s3 + $0xa4] sm:$0xf]
    %v479 = vld [vmem:[%s3 + $0xa8] sm:$0xf]
    %v480 = vld [vmem:[%s3 + $0xac] sm:$0xf]
    %v481 = vld [vmem:[%s3 + $0xb0] sm:$0xf]
    %v482 = vld [vmem:[%s3 + $0xb4] sm:$0xf]
    %v483 = vld [vmem:[%s3 + $0xb8] sm:$0xf]
    %v484 = vld [vmem:[%s3 + $0xbc] sm:$0xf]
    %v485 = vld [vmem:[%s3 + $0xc0] sm:$0xf]
    %v486 = vld [vmem:[%s3 + $0xc4] sm:$0xf]
    %v487 = vld [vmem:[%s3 + $0xc8] sm:$0xf]
    %v488 = vld [vmem:[%s3 + $0xcc] sm:$0xf]
    %v489 = vld [vmem:[%s3 + $0xd0] sm:$0xf]
    %v490 = vld [vmem:[%s3 + $0xd4] sm:$0xf]
    %v491 = vld [vmem:[%s3 + $0xd8] sm:$0xf]
    %v492 = vld [vmem:[%s3 + $0xdc] sm:$0xf]
    %v493 = vld [vmem:[%s3 + $0xe0] sm:$0xf]
    %v494 = vld [vmem:[%s3 + $0xe4] sm:$0xf]
    %v495 = vld [vmem:[%s3 + $0xe8] sm:$0xf]
    %v496 = vld [vmem:[%s3 + $0xec] sm:$0xf]
    %v497 = vld [vmem:[%s3 + $0xf0] sm:$0xf]
    %v498 = vld [vmem:[%s3 + $0xf4] sm:$0xf]
    %v499 = vld [vmem:[%s3 + $0xf8] sm:$0xf]
    %v500 = vld [vmem:[%s3 + $0xfc] sm:$0xf]
    %v501 = vld [vmem:[%s3 + $0x100] sm:$0xf]
    %v502 = vld [vmem:[%s3 + $0x104] sm:$0xf]
    %v503 = vld [vmem:[%s3 + $0x108] sm:$0xf]
    %v504 = vld [vmem:[%s3 + $0x10c] sm:$0xf]
    %v505 = vld [vmem:[%s3 + $0x110] sm:$0xf]
    %v506 = vld [vmem:[%s3 + $0x114] sm:$0xf]
    %v507 = vld [vmem:[%s3 + $0x118] sm:$0xf]
    %v508 = vld [vmem:[%s3 + $0x11c] sm:$0xf]
    %v517 = vunpack.c.l.b16 %v410
    %v518 = vunpack.c.l.b16 %v411
    %v519 = vunpack.c.l.b16 %v412
    %v520 = vunpack.c.l.b16 %v413
    %v521 = vunpack.c.l.b16 %v414
    %v522 = vunpack.c.l.b16 %v415
    %v523 = vunpack.c.l.b16 %v416
    %v524 = vunpack.c.l.b16 %v417
    %v525 = vpack.c.b16 %v518, %v517
    %v526 = vpack.c.b16 %v520, %v519
    %v527 = vpack.c.b16 %v522, %v521
    %v528 = vpack.c.b16 %v524, %v523
    %529 = vrot.lane.b32.xlu0 %v525, 96
    %v530 = vpop.permute.xlu0 %529
    %531 = vrot.lane.b32.xlu0 %v526, 96
    %v532 = vpop.permute.xlu0 %531
    %533 = vrot.lane.b32.xlu0 %v527, 96
    %v534 = vpop.permute.xlu0 %533
    %535 = vrot.lane.b32.xlu0 %v528, 96
    %v536 = vpop.permute.xlu0 %535
    %vm537 = vcmask 261120
    %v539 = vsel %vm537, %v525, 0
    %v542 = vsel %vm537, %v526, 0
    %v545 = vsel %vm537, %v527, 0
    %v548 = vsel %vm537, %v528, 0
    %v551 = vsel %vm537, %v530, 0
    %v554 = vsel %vm537, %v532, 0
    %v557 = vsel %vm537, %v534, 0
    %v560 = vsel %vm537, %v536, 0
    %562 = vmatpush.bf16.xpose.msra.mxu0 0
    %563 = vmatpush.bf16.xpose.msra.mxu0 0
    %564 = vmatpush.bf16.xpose.msra.mxu0 0
    %565 = vmatpush.bf16.xpose.msra.mxu0 0
    %566 = vmatpush.bf16.xpose.msra.mxu0 %v560
    %567 = vmatpush.bf16.xpose.msra.mxu0 %v557
    %568 = vmatpush.bf16.xpose.msra.mxu0 %v554
    %569 = vmatpush.bf16.xpose.msra.mxu0 %v551
    %570 = vmatmul.bf16.gmra.mxu0 %v539
    %v571 = vpop.f32.mrf.mxu0
    %v572 = vadd.f32 0.0, %v571
    %v573 = vpop.f32.mrf.mxu0
    %v574 = vadd.f32 0.0, %v573
    %575 = vmatmul.bf16.gmra.mxu0 %v542
    %v576 = vpop.f32.mrf.mxu0
    %v577 = vadd.f32 0.0, %v576
    %v578 = vpop.f32.mrf.mxu0
    %v579 = vadd.f32 0.0, %v578
    %580 = vmatmul.bf16.gmra.mxu0 %v545
    %v581 = vpop.f32.mrf.mxu0
    %v582 = vadd.f32 0.0, %v581
    %v583 = vpop.f32.mrf.mxu0
    %v584 = vadd.f32 0.0, %v583
    %585 = vmatmul.bf16.gmra.mxu0 %v548
    %v586 = vpop.f32.mrf.mxu0
    %v587 = vadd.f32 0.0, %v586
    %v588 = vpop.f32.mrf.mxu0
    %v589 = vadd.f32 0.0, %v588
    %590 = vdwg.mxu0
    %v591 = vsel %vm336, %v572, -inf
    %592 = vmax.xlane.f32.xlu0 %v591
    %v593 = vpop.xlane.xlu0 %592
    %v594 = vsel %vm336, %v574, -inf
    %595 = vmax.xlane.f32.xlu0 %v594
    %v596 = vpop.xlane.xlu0 %595
    %v597 = vsel %vm336, %v577, -inf
    %598 = vmax.xlane.f32.xlu0 %v597
    %v599 = vpop.xlane.xlu0 %598
    %v600 = vsel %vm336, %v579, -inf
    %601 = vmax.xlane.f32.xlu0 %v600
    %v602 = vpop.xlane.xlu0 %601
    %v603 = vsel %vm336, %v582, -inf
    %604 = vmax.xlane.f32.xlu0 %v603
    %v605 = vpop.xlane.xlu0 %604
    %v606 = vsel %vm336, %v584, -inf
    %607 = vmax.xlane.f32.xlu0 %v606
    %v608 = vpop.xlane.xlu0 %607
    %v609 = vsel %vm336, %v587, -inf
    %610 = vmax.xlane.f32.xlu0 %v609
    %v611 = vpop.xlane.xlu0 %610
    %v612 = vsel %vm336, %v589, -inf
    %613 = vmax.xlane.f32.xlu0 %v612
    %v614 = vpop.xlane.xlu0 %613
    %v615 = vsub.f32 %v572, %v593
    %v616 = vsub.f32 %v574, %v596
    %v617 = vsub.f32 %v577, %v599
    %v618 = vsub.f32 %v579, %v602
    %v619 = vsub.f32 %v582, %v605
    %v620 = vsub.f32 %v584, %v608
    %v621 = vsub.f32 %v587, %v611
    %v622 = vsub.f32 %v589, %v614
    %v623 = vmul.f32 %v615, 1.442695
    %v624 = vpow.pop %v623
    %v625 = vmul.f32 %v616, 1.442695
    %v626 = vpow.pop %v625
    %v627 = vmul.f32 %v617, 1.442695
    %v628 = vpow.pop %v627
    %v629 = vmul.f32 %v618, 1.442695
    %v630 = vpow.pop %v629
    %v631 = vmul.f32 %v619, 1.442695
    %v632 = vpow.pop %v631
    %v633 = vmul.f32 %v620, 1.442695
    %v634 = vpow.pop %v633
    %v635 = vmul.f32 %v621, 1.442695
    %v636 = vpow.pop %v635
    %v637 = vmul.f32 %v622, 1.442695
    %v638 = vpow.pop %v637
    %v639 = vsel %vm336, %v624, 0.0
    %640 = vadd.xlane.f32.xlu0 %v639
    %v641 = vpop.xlane.xlu0 %640
    %v642 = vsel %vm336, %v626, 0.0
    %643 = vadd.xlane.f32.xlu0 %v642
    %v644 = vpop.xlane.xlu0 %643
    %v645 = vsel %vm336, %v628, 0.0
    %646 = vadd.xlane.f32.xlu0 %v645
    %v647 = vpop.xlane.xlu0 %646
    %v648 = vsel %vm336, %v630, 0.0
    %649 = vadd.xlane.f32.xlu0 %v648
    %v650 = vpop.xlane.xlu0 %649
    %v651 = vsel %vm336, %v632, 0.0
    %652 = vadd.xlane.f32.xlu0 %v651
    %v653 = vpop.xlane.xlu0 %652
    %v654 = vsel %vm336, %v634, 0.0
    %655 = vadd.xlane.f32.xlu0 %v654
    %v656 = vpop.xlane.xlu0 %655
    %v657 = vsel %vm336, %v636, 0.0
    %658 = vadd.xlane.f32.xlu0 %v657
    %v659 = vpop.xlane.xlu0 %658
    %v660 = vsel %vm336, %v638, 0.0
    %661 = vadd.xlane.f32.xlu0 %v660
    %v662 = vpop.xlane.xlu0 %661
    %v663 = vrcp.pop %v641
    %v664 = vrcp.pop %v644
    %v665 = vrcp.pop %v647
    %v666 = vrcp.pop %v650
    %v667 = vrcp.pop %v653
    %v668 = vrcp.pop %v656
    %v669 = vrcp.pop %v659
    %v670 = vrcp.pop %v662
    %v671 = vmul.f32 %v624, %v663
    %v672 = vmul.f32 %v626, %v664
    %v673 = vmul.f32 %v628, %v665
    %v674 = vmul.f32 %v630, %v666
    %v675 = vmul.f32 %v632, %v667
    %v676 = vmul.f32 %v634, %v668
    %v677 = vmul.f32 %v636, %v669
    %v678 = vmul.f32 %v638, %v670
    %v679 = vpack.c.bf16 %v672, %v671
    %v680 = vpack.c.bf16 %v674, %v673
    %v681 = vpack.c.bf16 %v676, %v675
    %v682 = vpack.c.bf16 %v678, %v677
    %v755 = vunpack.c.l.b16 %v437
    %v756 = vunpack.c.l.b16 %v438
    %v757 = vunpack.c.l.b16 %v439
    %v758 = vunpack.c.l.b16 %v440
    %v759 = vunpack.c.l.b16 %v441
    %v760 = vunpack.c.l.b16 %v442
    %v761 = vunpack.c.l.b16 %v443
    %v762 = vunpack.c.l.b16 %v444
    %v763 = vunpack.c.l.b16 %v445
    %v764 = vunpack.c.l.b16 %v446
    %v765 = vunpack.c.l.b16 %v447
    %v766 = vunpack.c.l.b16 %v448
    %v767 = vunpack.c.l.b16 %v449
    %v768 = vunpack.c.l.b16 %v450
    %v769 = vunpack.c.l.b16 %v451
    %v770 = vunpack.c.l.b16 %v452
    %v771 = vunpack.c.l.b16 %v453
    %v772 = vunpack.c.l.b16 %v454
    %v773 = vunpack.c.l.b16 %v455
    %v774 = vunpack.c.l.b16 %v456
    %v775 = vunpack.c.l.b16 %v457
    %v776 = vunpack.c.l.b16 %v458
    %v777 = vunpack.c.l.b16 %v459
    %v778 = vunpack.c.l.b16 %v460
    %v779 = vunpack.c.l.b16 %v461
    %v780 = vunpack.c.l.b16 %v462
    %v781 = vunpack.c.l.b16 %v463
    %v782 = vunpack.c.l.b16 %v464
    %v783 = vunpack.c.l.b16 %v465
    %v784 = vunpack.c.l.b16 %v466
    %v785 = vunpack.c.l.b16 %v467
    %v786 = vunpack.c.l.b16 %v468
    %v787 = vunpack.c.l.b16 %v469
    %v788 = vunpack.c.l.b16 %v470
    %v789 = vunpack.c.l.b16 %v471
    %v790 = vunpack.c.l.b16 %v472
    %v791 = vunpack.c.l.b16 %v473
    %v792 = vunpack.c.l.b16 %v474
    %v793 = vunpack.c.l.b16 %v475
    %v794 = vunpack.c.l.b16 %v476
    %v795 = vunpack.c.l.b16 %v477
    %v796 = vunpack.c.l.b16 %v478
    %v797 = vunpack.c.l.b16 %v479
    %v798 = vunpack.c.l.b16 %v480
    %v799 = vunpack.c.l.b16 %v481
    %v800 = vunpack.c.l.b16 %v482
    %v801 = vunpack.c.l.b16 %v483
    %v802 = vunpack.c.l.b16 %v484
    %v803 = vunpack.c.l.b16 %v485
    %v804 = vunpack.c.l.b16 %v486
    %v805 = vunpack.c.l.b16 %v487
    %v806 = vunpack.c.l.b16 %v488
    %v807 = vunpack.c.l.b16 %v489
    %v808 = vunpack.c.l.b16 %v490
    %v809 = vunpack.c.l.b16 %v491
    %v810 = vunpack.c.l.b16 %v492
    %v811 = vunpack.c.l.b16 %v493
    %v812 = vunpack.c.l.b16 %v494
    %v813 = vunpack.c.l.b16 %v495
    %v814 = vunpack.c.l.b16 %v496
    %v815 = vunpack.c.l.b16 %v497
    %v816 = vunpack.c.l.b16 %v498
    %v817 = vunpack.c.l.b16 %v499
    %v818 = vunpack.c.l.b16 %v500
    %v819 = vunpack.c.l.b16 %v501
    %v820 = vunpack.c.l.b16 %v502
    %v821 = vunpack.c.l.b16 %v503
    %v822 = vunpack.c.l.b16 %v504
    %v823 = vunpack.c.l.b16 %v505
    %v824 = vunpack.c.l.b16 %v506
    %v825 = vunpack.c.l.b16 %v507
    %v826 = vunpack.c.l.b16 %v508
    %v827 = vpack.c.b16 %v756, %v755
    %v828 = vpack.c.b16 %v758, %v757
    %v829 = vpack.c.b16 %v760, %v759
    %v830 = vpack.c.b16 %v762, %v761
    %v831 = vpack.c.b16 %v764, %v763
    %v832 = vpack.c.b16 %v766, %v765
    %v833 = vpack.c.b16 %v768, %v767
    %v834 = vpack.c.b16 %v770, %v769
    %v835 = vpack.c.b16 %v772, %v771
    %v836 = vpack.c.b16 %v774, %v773
    %v837 = vpack.c.b16 %v776, %v775
    %v838 = vpack.c.b16 %v778, %v777
    %v839 = vpack.c.b16 %v780, %v779
    %v840 = vpack.c.b16 %v782, %v781
    %v841 = vpack.c.b16 %v784, %v783
    %v842 = vpack.c.b16 %v786, %v785
    %v843 = vpack.c.b16 %v788, %v787
    %v844 = vpack.c.b16 %v790, %v789
    %v845 = vpack.c.b16 %v792, %v791
    %v846 = vpack.c.b16 %v794, %v793
    %v847 = vpack.c.b16 %v796, %v795
    %v848 = vpack.c.b16 %v798, %v797
    %v849 = vpack.c.b16 %v800, %v799
    %v850 = vpack.c.b16 %v802, %v801
    %v851 = vpack.c.b16 %v804, %v803
    %v852 = vpack.c.b16 %v806, %v805
    %v853 = vpack.c.b16 %v808, %v807
    %v854 = vpack.c.b16 %v810, %v809
    %v855 = vpack.c.b16 %v812, %v811
    %v856 = vpack.c.b16 %v814, %v813
    %v857 = vpack.c.b16 %v816, %v815
    %v858 = vpack.c.b16 %v818, %v817
    %v859 = vpack.c.b16 %v820, %v819
    %v860 = vpack.c.b16 %v822, %v821
    %v861 = vpack.c.b16 %v824, %v823
    %v862 = vpack.c.b16 %v826, %v825
    %863 = vrot.lane.b32.xlu0 %v525, 64
    %v864 = vpop.permute.xlu0 %863
    %865 = vrot.lane.b32.xlu0 %v526, 64
    %v866 = vpop.permute.xlu0 %865
    %867 = vrot.lane.b32.xlu0 %v527, 64
    %v868 = vpop.permute.xlu0 %867
    %869 = vrot.lane.b32.xlu0 %v528, 64
    %v870 = vpop.permute.xlu0 %869
    %v876 = vsel %vm336, %v827, 0
    %v879 = vsel %vm336, %v828, 0
    %v882 = vsel %vm336, %v829, 0
    %v885 = vsel %vm336, %v830, 0
    %v888 = vsel %vm336, %v831, 0
    %v891 = vsel %vm336, %v832, 0
    %v894 = vsel %vm336, %v833, 0
    %v897 = vsel %vm336, %v834, 0
    %v900 = vsel %vm336, %v835, 0
    %v903 = vsel %vm336, %v836, 0
    %v906 = vsel %vm336, %v837, 0
    %v909 = vsel %vm336, %v838, 0
    %v912 = vsel %vm336, %v839, 0
    %v915 = vsel %vm336, %v840, 0
    %v918 = vsel %vm336, %v841, 0
    %v921 = vsel %vm336, %v842, 0
    %v924 = vsel %vm336, %v843, 0
    %v927 = vsel %vm336, %v844, 0
    %v930 = vsel %vm336, %v845, 0
    %v933 = vsel %vm336, %v846, 0
    %v936 = vsel %vm336, %v847, 0
    %v939 = vsel %vm336, %v848, 0
    %v942 = vsel %vm336, %v849, 0
    %v945 = vsel %vm336, %v850, 0
    %v948 = vsel %vm336, %v851, 0
    %v951 = vsel %vm336, %v852, 0
    %v954 = vsel %vm336, %v853, 0
    %v957 = vsel %vm336, %v854, 0
    %v960 = vsel %vm336, %v855, 0
    %v963 = vsel %vm336, %v856, 0
    %v966 = vsel %vm336, %v857, 0
    %v969 = vsel %vm336, %v858, 0
    %v972 = vsel %vm336, %v859, 0
    %v975 = vsel %vm336, %v860, 0
    %v978 = vsel %vm336, %v861, 0
    %v981 = vsel %vm336, %v862, 0
    %983 = vmatpush.bf16.msra.mxu0 0
    %984 = vmatpush.bf16.msra.mxu0 0
    %985 = vmatpush.bf16.msra.mxu0 0
    %986 = vmatpush.bf16.msra.mxu0 0
    %987 = vmatpush.bf16.msra.mxu0 %v870
    %988 = vmatpush.bf16.msra.mxu0 %v868
    %989 = vmatpush.bf16.msra.mxu0 %v866
    %990 = vmatpush.bf16.msra.mxu0 %v864
    %991 = vmatmul.bf16.gmra.mxu0 %v876
    %v992 = vpop.f32.mrf.mxu0
    %v993 = vadd.f32 0.0, %v992
    %v994 = vpop.f32.mrf.mxu0
    %v995 = vadd.f32 0.0, %v994
    %996 = vmatmul.bf16.gmra.mxu0 %v879
    %v997 = vpop.f32.mrf.mxu0
    %v998 = vadd.f32 0.0, %v997
    %v999 = vpop.f32.mrf.mxu0
    %v1000 = vadd.f32 0.0, %v999
    %1001 = vmatmul.bf16.gmra.mxu0 %v882
    %v1002 = vpop.f32.mrf.mxu0
    %v1003 = vadd.f32 0.0, %v1002
    %v1004 = vpop.f32.mrf.mxu0
    %v1005 = vadd.f32 0.0, %v1004
    %1006 = vmatmul.bf16.gmra.mxu0 %v885
    %v1007 = vpop.f32.mrf.mxu0
    %v1008 = vadd.f32 0.0, %v1007
    %v1009 = vpop.f32.mrf.mxu0
    %v1010 = vadd.f32 0.0, %v1009
    %1011 = vmatmul.bf16.gmra.mxu0 %v888
    %v1012 = vpop.f32.mrf.mxu0
    %v1013 = vadd.f32 0.0, %v1012
    %v1014 = vpop.f32.mrf.mxu0
    %v1015 = vadd.f32 0.0, %v1014
    %1016 = vmatmul.bf16.gmra.mxu0 %v891
    %v1017 = vpop.f32.mrf.mxu0
    %v1018 = vadd.f32 0.0, %v1017
    %v1019 = vpop.f32.mrf.mxu0
    %v1020 = vadd.f32 0.0, %v1019
    %1021 = vmatmul.bf16.gmra.mxu0 %v894
    %v1022 = vpop.f32.mrf.mxu0
    %v1023 = vadd.f32 0.0, %v1022
    %v1024 = vpop.f32.mrf.mxu0
    %v1025 = vadd.f32 0.0, %v1024
    %1026 = vmatmul.bf16.gmra.mxu0 %v897
    %v1027 = vpop.f32.mrf.mxu0
    %v1028 = vadd.f32 0.0, %v1027
    %v1029 = vpop.f32.mrf.mxu0
    %v1030 = vadd.f32 0.0, %v1029
    %1031 = vmatmul.bf16.gmra.mxu0 %v900
    %v1032 = vpop.f32.mrf.mxu0
    %v1033 = vadd.f32 0.0, %v1032
    %v1034 = vpop.f32.mrf.mxu0
    %v1035 = vadd.f32 0.0, %v1034
    %1036 = vmatmul.bf16.gmra.mxu0 %v903
    %v1037 = vpop.f32.mrf.mxu0
    %v1038 = vadd.f32 0.0, %v1037
    %v1039 = vpop.f32.mrf.mxu0
    %v1040 = vadd.f32 0.0, %v1039
    %1041 = vmatmul.bf16.gmra.mxu0 %v906
    %v1042 = vpop.f32.mrf.mxu0
    %v1043 = vadd.f32 0.0, %v1042
    %v1044 = vpop.f32.mrf.mxu0
    %v1045 = vadd.f32 0.0, %v1044
    %1046 = vmatmul.bf16.gmra.mxu0 %v909
    %v1047 = vpop.f32.mrf.mxu0
    %v1048 = vadd.f32 0.0, %v1047
    %v1049 = vpop.f32.mrf.mxu0
    %v1050 = vadd.f32 0.0, %v1049
    %1051 = vmatmul.bf16.gmra.mxu0 %v912
    %v1052 = vpop.f32.mrf.mxu0
    %v1053 = vadd.f32 0.0, %v1052
    %v1054 = vpop.f32.mrf.mxu0
    %v1055 = vadd.f32 0.0, %v1054
    %1056 = vmatmul.bf16.gmra.mxu0 %v915
    %v1057 = vpop.f32.mrf.mxu0
    %v1058 = vadd.f32 0.0, %v1057
    %v1059 = vpop.f32.mrf.mxu0
    %v1060 = vadd.f32 0.0, %v1059
    %1061 = vmatmul.bf16.gmra.mxu0 %v918
    %v1062 = vpop.f32.mrf.mxu0
    %v1063 = vadd.f32 0.0, %v1062
    %v1064 = vpop.f32.mrf.mxu0
    %v1065 = vadd.f32 0.0, %v1064
    %1066 = vmatmul.bf16.gmra.mxu0 %v921
    %v1067 = vpop.f32.mrf.mxu0
    %v1068 = vadd.f32 0.0, %v1067
    %v1069 = vpop.f32.mrf.mxu0
    %v1070 = vadd.f32 0.0, %v1069
    %1071 = vmatmul.bf16.gmra.mxu0 %v924
    %v1072 = vpop.f32.mrf.mxu0
    %v1073 = vadd.f32 0.0, %v1072
    %v1074 = vpop.f32.mrf.mxu0
    %v1075 = vadd.f32 0.0, %v1074
    %1076 = vmatmul.bf16.gmra.mxu0 %v927
    %v1077 = vpop.f32.mrf.mxu0
    %v1078 = vadd.f32 0.0, %v1077
    %v1079 = vpop.f32.mrf.mxu0
    %v1080 = vadd.f32 0.0, %v1079
    %1081 = vmatmul.bf16.gmra.mxu0 %v930
    %v1082 = vpop.f32.mrf.mxu0
    %v1083 = vadd.f32 0.0, %v1082
    %v1084 = vpop.f32.mrf.mxu0
    %v1085 = vadd.f32 0.0, %v1084
    %1086 = vmatmul.bf16.gmra.mxu0 %v933
    %v1087 = vpop.f32.mrf.mxu0
    %v1088 = vadd.f32 0.0, %v1087
    %v1089 = vpop.f32.mrf.mxu0
    %v1090 = vadd.f32 0.0, %v1089
    %1091 = vmatmul.bf16.gmra.mxu0 %v936
    %v1092 = vpop.f32.mrf.mxu0
    %v1093 = vadd.f32 0.0, %v1092
    %v1094 = vpop.f32.mrf.mxu0
    %v1095 = vadd.f32 0.0, %v1094
    %1096 = vmatmul.bf16.gmra.mxu0 %v939
    %v1097 = vpop.f32.mrf.mxu0
    %v1098 = vadd.f32 0.0, %v1097
    %v1099 = vpop.f32.mrf.mxu0
    %v1100 = vadd.f32 0.0, %v1099
    %1101 = vmatmul.bf16.gmra.mxu0 %v942
    %v1102 = vpop.f32.mrf.mxu0
    %v1103 = vadd.f32 0.0, %v1102
    %v1104 = vpop.f32.mrf.mxu0
    %v1105 = vadd.f32 0.0, %v1104
    %1106 = vmatmul.bf16.gmra.mxu0 %v945
    %v1107 = vpop.f32.mrf.mxu0
    %v1108 = vadd.f32 0.0, %v1107
    %v1109 = vpop.f32.mrf.mxu0
    %v1110 = vadd.f32 0.0, %v1109
    %1111 = vmatmul.bf16.gmra.mxu0 %v948
    %v1112 = vpop.f32.mrf.mxu0
    %v1113 = vadd.f32 0.0, %v1112
    %v1114 = vpop.f32.mrf.mxu0
    %v1115 = vadd.f32 0.0, %v1114
    %1116 = vmatmul.bf16.gmra.mxu0 %v951
    %v1117 = vpop.f32.mrf.mxu0
    %v1118 = vadd.f32 0.0, %v1117
    %v1119 = vpop.f32.mrf.mxu0
    %v1120 = vadd.f32 0.0, %v1119
    %1121 = vmatmul.bf16.gmra.mxu0 %v954
    %v1122 = vpop.f32.mrf.mxu0
    %v1123 = vadd.f32 0.0, %v1122
    %v1124 = vpop.f32.mrf.mxu0
    %v1125 = vadd.f32 0.0, %v1124
    %1126 = vmatmul.bf16.gmra.mxu0 %v957
    %v1127 = vpop.f32.mrf.mxu0
    %v1128 = vadd.f32 0.0, %v1127
    %v1129 = vpop.f32.mrf.mxu0
    %v1130 = vadd.f32 0.0, %v1129
    %1131 = vmatmul.bf16.gmra.mxu0 %v960
    %v1132 = vpop.f32.mrf.mxu0
    %v1133 = vadd.f32 0.0, %v1132
    %v1134 = vpop.f32.mrf.mxu0
    %v1135 = vadd.f32 0.0, %v1134
    %1136 = vmatmul.bf16.gmra.mxu0 %v963
    %v1137 = vpop.f32.mrf.mxu0
    %v1138 = vadd.f32 0.0, %v1137
    %v1139 = vpop.f32.mrf.mxu0
    %v1140 = vadd.f32 0.0, %v1139
    %1141 = vmatmul.bf16.gmra.mxu0 %v966
    %v1142 = vpop.f32.mrf.mxu0
    %v1143 = vadd.f32 0.0, %v1142
    %v1144 = vpop.f32.mrf.mxu0
    %v1145 = vadd.f32 0.0, %v1144
    %1146 = vmatmul.bf16.gmra.mxu0 %v969
    %v1147 = vpop.f32.mrf.mxu0
    %v1148 = vadd.f32 0.0, %v1147
    %v1149 = vpop.f32.mrf.mxu0
    %v1150 = vadd.f32 0.0, %v1149
    %1151 = vmatmul.bf16.gmra.mxu0 %v972
    %v1152 = vpop.f32.mrf.mxu0
    %v1153 = vadd.f32 0.0, %v1152
    %v1154 = vpop.f32.mrf.mxu0
    %v1155 = vadd.f32 0.0, %v1154
    %1156 = vmatmul.bf16.gmra.mxu0 %v975
    %v1157 = vpop.f32.mrf.mxu0
    %v1158 = vadd.f32 0.0, %v1157
    %v1159 = vpop.f32.mrf.mxu0
    %v1160 = vadd.f32 0.0, %v1159
    %1161 = vmatmul.bf16.gmra.mxu0 %v978
    %v1162 = vpop.f32.mrf.mxu0
    %v1163 = vadd.f32 0.0, %v1162
    %v1164 = vpop.f32.mrf.mxu0
    %v1165 = vadd.f32 0.0, %v1164
    %1166 = vmatmul.bf16.gmra.mxu0 %v981
    %v1167 = vpop.f32.mrf.mxu0
    %v1168 = vadd.f32 0.0, %v1167
    %v1169 = vpop.f32.mrf.mxu0
    %v1170 = vadd.f32 0.0, %v1169
    %1171 = vdwg.mxu0
    %v1172 = vperm.slane %v426, 0
    %v1173 = vperm.slane %v430, 0
    %v1174 = vperm.slane %v431, 0
    %v1175 = vperm.slane %v432, 0
    %v1176 = vperm.slane %v433, 0
    %v1177 = vperm.slane %v434, 0
    %v1178 = vperm.slane %v435, 0
    %v1179 = vperm.slane %v436, 0
    %v1180 = vperm.slane %v427, 0
    %v1190 = vmul.f32 %v993, %v1172
    %v1191 = vmul.f32 %v995, %v1172
    %v1192 = vmul.f32 %v998, %v1172
    %v1193 = vmul.f32 %v1000, %v1172
    %v1194 = vmul.f32 %v1003, %v1172
    %v1195 = vmul.f32 %v1005, %v1172
    %v1196 = vmul.f32 %v1008, %v1172
    %v1197 = vmul.f32 %v1010, %v1172
    %v1198 = vmul.f32 %v1013, %v1173
    %v1199 = vmul.f32 %v1015, %v1173
    %v1200 = vmul.f32 %v1018, %v1173
    %v1201 = vmul.f32 %v1020, %v1173
    %v1202 = vmul.f32 %v1023, %v1173
    %v1203 = vmul.f32 %v1025, %v1173
    %v1204 = vmul.f32 %v1028, %v1173
    %v1205 = vmul.f32 %v1030, %v1173
    %v1206 = vmul.f32 %v1033, %v1174
    %v1207 = vmul.f32 %v1035, %v1174
    %v1208 = vmul.f32 %v1038, %v1174
    %v1209 = vmul.f32 %v1040, %v1174
    %v1210 = vmul.f32 %v1043, %v1174
    %v1211 = vmul.f32 %v1045, %v1174
    %v1212 = vmul.f32 %v1048, %v1174
    %v1213 = vmul.f32 %v1050, %v1174
    %v1214 = vmul.f32 %v1053, %v1175
    %v1215 = vmul.f32 %v1055, %v1175
    %v1216 = vmul.f32 %v1058, %v1175
    %v1217 = vmul.f32 %v1060, %v1175
    %v1218 = vmul.f32 %v1063, %v1175
    %v1219 = vmul.f32 %v1065, %v1175
    %v1220 = vmul.f32 %v1068, %v1175
    %v1221 = vmul.f32 %v1070, %v1175
    %v1222 = vmul.f32 %v1073, %v1176
    %v1223 = vmul.f32 %v1075, %v1176
    %v1224 = vmul.f32 %v1078, %v1176
    %v1225 = vmul.f32 %v1080, %v1176
    %v1226 = vmul.f32 %v1083, %v1176
    %v1227 = vmul.f32 %v1085, %v1176
    %v1228 = vmul.f32 %v1088, %v1176
    %v1229 = vmul.f32 %v1090, %v1176
    %v1230 = vmul.f32 %v1093, %v1177
    %v1231 = vmul.f32 %v1095, %v1177
    %v1232 = vmul.f32 %v1098, %v1177
    %v1233 = vmul.f32 %v1100, %v1177
    %v1234 = vmul.f32 %v1103, %v1177
    %v1235 = vmul.f32 %v1105, %v1177
    %v1236 = vmul.f32 %v1108, %v1177
    %v1237 = vmul.f32 %v1110, %v1177
    %v1238 = vmul.f32 %v1113, %v1178
    %v1239 = vmul.f32 %v1115, %v1178
    %v1240 = vmul.f32 %v1118, %v1178
    %v1241 = vmul.f32 %v1120, %v1178
    %v1242 = vmul.f32 %v1123, %v1178
    %v1243 = vmul.f32 %v1125, %v1178
    %v1244 = vmul.f32 %v1128, %v1178
    %v1245 = vmul.f32 %v1130, %v1178
    %v1246 = vmul.f32 %v1133, %v1179
    %v1247 = vmul.f32 %v1135, %v1179
    %v1248 = vmul.f32 %v1138, %v1179
    %v1249 = vmul.f32 %v1140, %v1179
    %v1250 = vmul.f32 %v1143, %v1179
    %v1251 = vmul.f32 %v1145, %v1179
    %v1252 = vmul.f32 %v1148, %v1179
    %v1253 = vmul.f32 %v1150, %v1179
    %v1254 = vmul.f32 %v1153, %v1180
    %v1255 = vmul.f32 %v1155, %v1180
    %v1256 = vmul.f32 %v1158, %v1180
    %v1257 = vmul.f32 %v1160, %v1180
    %v1258 = vmul.f32 %v1163, %v1180
    %v1259 = vmul.f32 %v1165, %v1180
    %v1260 = vmul.f32 %v1168, %v1180
    %v1261 = vmul.f32 %v1170, %v1180
    %v1262 = vsel %vm336, %v1190, 0.0
    %v1263 = vsel %vm336, %v1198, 0.0
    %v1264 = vadd.f32 %v1262, %v1263
    %v1265 = vsel %vm336, %v1206, 0.0
    %v1266 = vadd.f32 %v1264, %v1265
    %v1267 = vsel %vm336, %v1214, 0.0
    %v1268 = vadd.f32 %v1266, %v1267
    %v1269 = vsel %vm336, %v1222, 0.0
    %v1270 = vadd.f32 %v1268, %v1269
    %v1271 = vsel %vm336, %v1230, 0.0
    %v1272 = vadd.f32 %v1270, %v1271
    %v1273 = vsel %vm336, %v1238, 0.0
    %v1274 = vadd.f32 %v1272, %v1273
    %v1275 = vsel %vm336, %v1246, 0.0
    %v1276 = vadd.f32 %v1274, %v1275
    %v1277 = vsel %vm336, %v1254, 0.0
    %v1278 = vadd.f32 %v1276, %v1277
    %v1279 = vsel %vm336, %v1191, 0.0
    %v1280 = vsel %vm336, %v1199, 0.0
    %v1281 = vadd.f32 %v1279, %v1280
    %v1282 = vsel %vm336, %v1207, 0.0
    %v1283 = vadd.f32 %v1281, %v1282
    %v1284 = vsel %vm336, %v1215, 0.0
    %v1285 = vadd.f32 %v1283, %v1284
    %v1286 = vsel %vm336, %v1223, 0.0
    %v1287 = vadd.f32 %v1285, %v1286
    %v1288 = vsel %vm336, %v1231, 0.0
    %v1289 = vadd.f32 %v1287, %v1288
    %v1290 = vsel %vm336, %v1239, 0.0
    %v1291 = vadd.f32 %v1289, %v1290
    %v1292 = vsel %vm336, %v1247, 0.0
    %v1293 = vadd.f32 %v1291, %v1292
    %v1294 = vsel %vm336, %v1255, 0.0
    %v1295 = vadd.f32 %v1293, %v1294
    %v1296 = vsel %vm336, %v1192, 0.0
    %v1297 = vsel %vm336, %v1200, 0.0
    %v1298 = vadd.f32 %v1296, %v1297
    %v1299 = vsel %vm336, %v1208, 0.0
    %v1300 = vadd.f32 %v1298, %v1299
    %v1301 = vsel %vm336, %v1216, 0.0
    %v1302 = vadd.f32 %v1300, %v1301
    %v1303 = vsel %vm336, %v1224, 0.0
    %v1304 = vadd.f32 %v1302, %v1303
    %v1305 = vsel %vm336, %v1232, 0.0
    %v1306 = vadd.f32 %v1304, %v1305
    %v1307 = vsel %vm336, %v1240, 0.0
    %v1308 = vadd.f32 %v1306, %v1307
    %v1309 = vsel %vm336, %v1248, 0.0
    %v1310 = vadd.f32 %v1308, %v1309
    %v1311 = vsel %vm336, %v1256, 0.0
    %v1312 = vadd.f32 %v1310, %v1311
    %v1313 = vsel %vm336, %v1193, 0.0
    %v1314 = vsel %vm336, %v1201, 0.0
    %v1315 = vadd.f32 %v1313, %v1314
    %v1316 = vsel %vm336, %v1209, 0.0
    %v1317 = vadd.f32 %v1315, %v1316
    %v1318 = vsel %vm336, %v1217, 0.0
    %v1319 = vadd.f32 %v1317, %v1318
    %v1320 = vsel %vm336, %v1225, 0.0
    %v1321 = vadd.f32 %v1319, %v1320
    %v1322 = vsel %vm336, %v1233, 0.0
    %v1323 = vadd.f32 %v1321, %v1322
    %v1324 = vsel %vm336, %v1241, 0.0
    %v1325 = vadd.f32 %v1323, %v1324
    %v1326 = vsel %vm336, %v1249, 0.0
    %v1327 = vadd.f32 %v1325, %v1326
    %v1328 = vsel %vm336, %v1257, 0.0
    %v1329 = vadd.f32 %v1327, %v1328
    %v1330 = vsel %vm336, %v1194, 0.0
    %v1331 = vsel %vm336, %v1202, 0.0
    %v1332 = vadd.f32 %v1330, %v1331
    %v1333 = vsel %vm336, %v1210, 0.0
    %v1334 = vadd.f32 %v1332, %v1333
    %v1335 = vsel %vm336, %v1218, 0.0
    %v1336 = vadd.f32 %v1334, %v1335
    %v1337 = vsel %vm336, %v1226, 0.0
    %v1338 = vadd.f32 %v1336, %v1337
    %v1339 = vsel %vm336, %v1234, 0.0
    %v1340 = vadd.f32 %v1338, %v1339
    %v1341 = vsel %vm336, %v1242, 0.0
    %v1342 = vadd.f32 %v1340, %v1341
    %v1343 = vsel %vm336, %v1250, 0.0
    %v1344 = vadd.f32 %v1342, %v1343
    %v1345 = vsel %vm336, %v1258, 0.0
    %v1346 = vadd.f32 %v1344, %v1345
    %v1347 = vsel %vm336, %v1195, 0.0
    %v1348 = vsel %vm336, %v1203, 0.0
    %v1349 = vadd.f32 %v1347, %v1348
    %v1350 = vsel %vm336, %v1211, 0.0
    %v1351 = vadd.f32 %v1349, %v1350
    %v1352 = vsel %vm336, %v1219, 0.0
    %v1353 = vadd.f32 %v1351, %v1352
    %v1354 = vsel %vm336, %v1227, 0.0
    %v1355 = vadd.f32 %v1353, %v1354
    %v1356 = vsel %vm336, %v1235, 0.0
    %v1357 = vadd.f32 %v1355, %v1356
    %v1358 = vsel %vm336, %v1243, 0.0
    %v1359 = vadd.f32 %v1357, %v1358
    %v1360 = vsel %vm336, %v1251, 0.0
    %v1361 = vadd.f32 %v1359, %v1360
    %v1362 = vsel %vm336, %v1259, 0.0
    %v1363 = vadd.f32 %v1361, %v1362
    %v1364 = vsel %vm336, %v1196, 0.0
    %v1365 = vsel %vm336, %v1204, 0.0
    %v1366 = vadd.f32 %v1364, %v1365
    %v1367 = vsel %vm336, %v1212, 0.0
    %v1368 = vadd.f32 %v1366, %v1367
    %v1369 = vsel %vm336, %v1220, 0.0
    %v1370 = vadd.f32 %v1368, %v1369
    %v1371 = vsel %vm336, %v1228, 0.0
    %v1372 = vadd.f32 %v1370, %v1371
    %v1373 = vsel %vm336, %v1236, 0.0
    %v1374 = vadd.f32 %v1372, %v1373
    %v1375 = vsel %vm336, %v1244, 0.0
    %v1376 = vadd.f32 %v1374, %v1375
    %v1377 = vsel %vm336, %v1252, 0.0
    %v1378 = vadd.f32 %v1376, %v1377
    %v1379 = vsel %vm336, %v1260, 0.0
    %v1380 = vadd.f32 %v1378, %v1379
    %v1381 = vsel %vm336, %v1197, 0.0
    %v1382 = vsel %vm336, %v1205, 0.0
    %v1383 = vadd.f32 %v1381, %v1382
    %v1384 = vsel %vm336, %v1213, 0.0
    %v1385 = vadd.f32 %v1383, %v1384
    %v1386 = vsel %vm336, %v1221, 0.0
    %v1387 = vadd.f32 %v1385, %v1386
    %v1388 = vsel %vm336, %v1229, 0.0
    %v1389 = vadd.f32 %v1387, %v1388
    %v1390 = vsel %vm336, %v1237, 0.0
    %v1391 = vadd.f32 %v1389, %v1390
    %v1392 = vsel %vm336, %v1245, 0.0
    %v1393 = vadd.f32 %v1391, %v1392
    %v1394 = vsel %vm336, %v1253, 0.0
    %v1395 = vadd.f32 %v1393, %v1394
    %v1396 = vsel %vm336, %v1261, 0.0
    %v1397 = vadd.f32 %v1395, %v1396
    %v1399 = vsel %vm336, %v679, 0
    %v1402 = vsel %vm336, %v680, 0
    %v1405 = vsel %vm336, %v681, 0
    %v1408 = vsel %vm336, %v682, 0
    %1410 = vmatpush.bf16.msra.mxu0 0
    %1411 = vmatpush.bf16.msra.mxu0 0
    %1412 = vmatpush.bf16.msra.mxu0 0
    %1413 = vmatpush.bf16.msra.mxu0 0
    %1414 = vmatpush.bf16.msra.mxu0 %v870
    %1415 = vmatpush.bf16.msra.mxu0 %v868
    %1416 = vmatpush.bf16.msra.mxu0 %v866
    %1417 = vmatpush.bf16.msra.mxu0 %v864
    %1418 = vmatmul.bf16.gmra.mxu0 %v1399
    %v1419 = vpop.f32.mrf.mxu0
    %v1420 = vadd.f32 %v1278, %v1419
    %v1421 = vpop.f32.mrf.mxu0
    %v1422 = vadd.f32 %v1295, %v1421
    %1423 = vmatmul.bf16.gmra.mxu0 %v1402
    %v1424 = vpop.f32.mrf.mxu0
    %v1425 = vadd.f32 %v1312, %v1424
    %v1426 = vpop.f32.mrf.mxu0
    %v1427 = vadd.f32 %v1329, %v1426
    %1428 = vmatmul.bf16.gmra.mxu0 %v1405
    %v1429 = vpop.f32.mrf.mxu0
    %v1430 = vadd.f32 %v1346, %v1429
    %v1431 = vpop.f32.mrf.mxu0
    %v1432 = vadd.f32 %v1363, %v1431
    %1433 = vmatmul.bf16.gmra.mxu0 %v1408
    %v1434 = vpop.f32.mrf.mxu0
    %v1435 = vadd.f32 %v1380, %v1434
    %v1436 = vpop.f32.mrf.mxu0
    %v1437 = vadd.f32 %v1397, %v1436
    %1438 = vdwg.mxu0
    %v1447 = vunpack.c.l.b16 %v418
    %v1448 = vunpack.c.l.b16 %v419
    %v1449 = vunpack.c.l.b16 %v420
    %v1450 = vunpack.c.l.b16 %v421
    %v1451 = vunpack.c.l.b16 %v422
    %v1452 = vunpack.c.l.b16 %v423
    %v1453 = vunpack.c.l.b16 %v424
    %v1454 = vunpack.c.l.b16 %v425
    %v1455 = vpack.c.b16 %v1448, %v1447
    %v1456 = vpack.c.b16 %v1450, %v1449
    %v1457 = vpack.c.b16 %v1452, %v1451
    %v1458 = vpack.c.b16 %v1454, %v1453
    %1459 = vrot.lane.b32.xlu0 %v1455, 96
    %v1460 = vpop.permute.xlu0 %1459
    %1461 = vrot.lane.b32.xlu0 %v1456, 96
    %v1462 = vpop.permute.xlu0 %1461
    %1463 = vrot.lane.b32.xlu0 %v1457, 96
    %v1464 = vpop.permute.xlu0 %1463
    %1465 = vrot.lane.b32.xlu0 %v1458, 96
    %v1466 = vpop.permute.xlu0 %1465
    %v1468 = vsel %vm537, %v1455, 0
    %v1471 = vsel %vm537, %v1456, 0
    %v1474 = vsel %vm537, %v1457, 0
    %v1477 = vsel %vm537, %v1458, 0
    %v1480 = vsel %vm537, %v1460, 0
    %v1483 = vsel %vm537, %v1462, 0
    %v1486 = vsel %vm537, %v1464, 0
    %v1489 = vsel %vm537, %v1466, 0
    %1491 = vmatpush.bf16.xpose.msra.mxu0 0
    %1492 = vmatpush.bf16.xpose.msra.mxu0 0
    %1493 = vmatpush.bf16.xpose.msra.mxu0 0
    %1494 = vmatpush.bf16.xpose.msra.mxu0 0
    %1495 = vmatpush.bf16.xpose.msra.mxu0 %v1489
    %1496 = vmatpush.bf16.xpose.msra.mxu0 %v1486
    %1497 = vmatpush.bf16.xpose.msra.mxu0 %v1483
    %1498 = vmatpush.bf16.xpose.msra.mxu0 %v1480
    %1499 = vmatmul.bf16.gmra.mxu0 %v1468
    %v1500 = vpop.f32.mrf.mxu0
    %v1501 = vadd.f32 0.0, %v1500
    %v1502 = vpop.f32.mrf.mxu0
    %v1503 = vadd.f32 0.0, %v1502
    %1504 = vmatmul.bf16.gmra.mxu0 %v1471
    %v1505 = vpop.f32.mrf.mxu0
    %v1506 = vadd.f32 0.0, %v1505
    %v1507 = vpop.f32.mrf.mxu0
    %v1508 = vadd.f32 0.0, %v1507
    %1509 = vmatmul.bf16.gmra.mxu0 %v1474
    %v1510 = vpop.f32.mrf.mxu0
    %v1511 = vadd.f32 0.0, %v1510
    %v1512 = vpop.f32.mrf.mxu0
    %v1513 = vadd.f32 0.0, %v1512
    %1514 = vmatmul.bf16.gmra.mxu0 %v1477
    %v1515 = vpop.f32.mrf.mxu0
    %v1516 = vadd.f32 0.0, %v1515
    %v1517 = vpop.f32.mrf.mxu0
    %v1518 = vadd.f32 0.0, %v1517
    %1519 = vdwg.mxu0
    %v1520 = vsel %vm336, %v1501, -inf
    %1521 = vmax.xlane.f32.xlu0 %v1520
    %v1522 = vpop.xlane.xlu0 %1521
    %v1523 = vsel %vm336, %v1503, -inf
    %1524 = vmax.xlane.f32.xlu0 %v1523
    %v1525 = vpop.xlane.xlu0 %1524
    %v1526 = vsel %vm336, %v1506, -inf
    %1527 = vmax.xlane.f32.xlu0 %v1526
    %v1528 = vpop.xlane.xlu0 %1527
    %v1529 = vsel %vm336, %v1508, -inf
    %1530 = vmax.xlane.f32.xlu0 %v1529
    %v1531 = vpop.xlane.xlu0 %1530
    %v1532 = vsel %vm336, %v1511, -inf
    %1533 = vmax.xlane.f32.xlu0 %v1532
    %v1534 = vpop.xlane.xlu0 %1533
    %v1535 = vsel %vm336, %v1513, -inf
    %1536 = vmax.xlane.f32.xlu0 %v1535
    %v1537 = vpop.xlane.xlu0 %1536
    %v1538 = vsel %vm336, %v1516, -inf
    %1539 = vmax.xlane.f32.xlu0 %v1538
    %v1540 = vpop.xlane.xlu0 %1539
    %v1541 = vsel %vm336, %v1518, -inf
    %1542 = vmax.xlane.f32.xlu0 %v1541
    %v1543 = vpop.xlane.xlu0 %1542
    %v1544 = vsub.f32 %v1501, %v1522
    %v1545 = vsub.f32 %v1503, %v1525
    %v1546 = vsub.f32 %v1506, %v1528
    %v1547 = vsub.f32 %v1508, %v1531
    %v1548 = vsub.f32 %v1511, %v1534
    %v1549 = vsub.f32 %v1513, %v1537
    %v1550 = vsub.f32 %v1516, %v1540
    %v1551 = vsub.f32 %v1518, %v1543
    %v1552 = vmul.f32 %v1544, 1.442695
    %v1553 = vpow.pop %v1552
    %v1554 = vmul.f32 %v1545, 1.442695
    %v1555 = vpow.pop %v1554
    %v1556 = vmul.f32 %v1546, 1.442695
    %v1557 = vpow.pop %v1556
    %v1558 = vmul.f32 %v1547, 1.442695
    %v1559 = vpow.pop %v1558
    %v1560 = vmul.f32 %v1548, 1.442695
    %v1561 = vpow.pop %v1560
    %v1562 = vmul.f32 %v1549, 1.442695
    %v1563 = vpow.pop %v1562
    %v1564 = vmul.f32 %v1550, 1.442695
    %v1565 = vpow.pop %v1564
    %v1566 = vmul.f32 %v1551, 1.442695
    %v1567 = vpow.pop %v1566
    %v1568 = vsel %vm336, %v1553, 0.0
    %1569 = vadd.xlane.f32.xlu0 %v1568
    %v1570 = vpop.xlane.xlu0 %1569
    %v1571 = vsel %vm336, %v1555, 0.0
    %1572 = vadd.xlane.f32.xlu0 %v1571
    %v1573 = vpop.xlane.xlu0 %1572
    %v1574 = vsel %vm336, %v1557, 0.0
    %1575 = vadd.xlane.f32.xlu0 %v1574
    %v1576 = vpop.xlane.xlu0 %1575
    %v1577 = vsel %vm336, %v1559, 0.0
    %1578 = vadd.xlane.f32.xlu0 %v1577
    %v1579 = vpop.xlane.xlu0 %1578
    %v1580 = vsel %vm336, %v1561, 0.0
    %1581 = vadd.xlane.f32.xlu0 %v1580
    %v1582 = vpop.xlane.xlu0 %1581
    %v1583 = vsel %vm336, %v1563, 0.0
    %1584 = vadd.xlane.f32.xlu0 %v1583
    %v1585 = vpop.xlane.xlu0 %1584
    %v1586 = vsel %vm336, %v1565, 0.0
    %1587 = vadd.xlane.f32.xlu0 %v1586
    %v1588 = vpop.xlane.xlu0 %1587
    %v1589 = vsel %vm336, %v1567, 0.0
    %1590 = vadd.xlane.f32.xlu0 %v1589
    %v1591 = vpop.xlane.xlu0 %1590
    %v1592 = vrcp.pop %v1570
    %v1593 = vrcp.pop %v1573
    %v1594 = vrcp.pop %v1576
    %v1595 = vrcp.pop %v1579
    %v1596 = vrcp.pop %v1582
    %v1597 = vrcp.pop %v1585
    %v1598 = vrcp.pop %v1588
    %v1599 = vrcp.pop %v1591
    %v1600 = vmul.f32 %v1553, %v1592
    %v1601 = vmul.f32 %v1555, %v1593
    %v1602 = vmul.f32 %v1557, %v1594
    %v1603 = vmul.f32 %v1559, %v1595
    %v1604 = vmul.f32 %v1561, %v1596
    %v1605 = vmul.f32 %v1563, %v1597
    %v1606 = vmul.f32 %v1565, %v1598
    %v1607 = vmul.f32 %v1567, %v1599
    %v1608 = vpack.c.bf16 %v1601, %v1600
    %v1609 = vpack.c.bf16 %v1603, %v1602
    %v1610 = vpack.c.bf16 %v1605, %v1604
    %v1611 = vpack.c.bf16 %v1607, %v1606
    %1612 = vrot.lane.b32.xlu0 %v1455, 64
    %v1613 = vpop.permute.xlu0 %1612
    %1614 = vrot.lane.b32.xlu0 %v1456, 64
    %v1615 = vpop.permute.xlu0 %1614
    %1616 = vrot.lane.b32.xlu0 %v1457, 64
    %v1617 = vpop.permute.xlu0 %1616
    %1618 = vrot.lane.b32.xlu0 %v1458, 64
    %v1619 = vpop.permute.xlu0 %1618
    %1624 = vmatpush.bf16.msra.mxu0 0
    %1625 = vmatpush.bf16.msra.mxu0 0
    %1626 = vmatpush.bf16.msra.mxu0 0
    %1627 = vmatpush.bf16.msra.mxu0 0
    %1628 = vmatpush.bf16.msra.mxu0 %v1619
    %1629 = vmatpush.bf16.msra.mxu0 %v1617
    %1630 = vmatpush.bf16.msra.mxu0 %v1615
    %1631 = vmatpush.bf16.msra.mxu0 %v1613
    %1632 = vmatmul.bf16.gmra.mxu0 %v876
    %v1633 = vpop.f32.mrf.mxu0
    %v1634 = vadd.f32 0.0, %v1633
    %v1635 = vpop.f32.mrf.mxu0
    %v1636 = vadd.f32 0.0, %v1635
    %1637 = vmatmul.bf16.gmra.mxu0 %v879
    %v1638 = vpop.f32.mrf.mxu0
    %v1639 = vadd.f32 0.0, %v1638
    %v1640 = vpop.f32.mrf.mxu0
    %v1641 = vadd.f32 0.0, %v1640
    %1642 = vmatmul.bf16.gmra.mxu0 %v882
    %v1643 = vpop.f32.mrf.mxu0
    %v1644 = vadd.f32 0.0, %v1643
    %v1645 = vpop.f32.mrf.mxu0
    %v1646 = vadd.f32 0.0, %v1645
    %1647 = vmatmul.bf16.gmra.mxu0 %v885
    %v1648 = vpop.f32.mrf.mxu0
    %v1649 = vadd.f32 0.0, %v1648
    %v1650 = vpop.f32.mrf.mxu0
    %v1651 = vadd.f32 0.0, %v1650
    %1652 = vmatmul.bf16.gmra.mxu0 %v888
    %v1653 = vpop.f32.mrf.mxu0
    %v1654 = vadd.f32 0.0, %v1653
    %v1655 = vpop.f32.mrf.mxu0
    %v1656 = vadd.f32 0.0, %v1655
    %1657 = vmatmul.bf16.gmra.mxu0 %v891
    %v1658 = vpop.f32.mrf.mxu0
    %v1659 = vadd.f32 0.0, %v1658
    %v1660 = vpop.f32.mrf.mxu0
    %v1661 = vadd.f32 0.0, %v1660
    %1662 = vmatmul.bf16.gmra.mxu0 %v894
    %v1663 = vpop.f32.mrf.mxu0
    %v1664 = vadd.f32 0.0, %v1663
    %v1665 = vpop.f32.mrf.mxu0
    %v1666 = vadd.f32 0.0, %v1665
    %1667 = vmatmul.bf16.gmra.mxu0 %v897
    %v1668 = vpop.f32.mrf.mxu0
    %v1669 = vadd.f32 0.0, %v1668
    %v1670 = vpop.f32.mrf.mxu0
    %v1671 = vadd.f32 0.0, %v1670
    %1672 = vmatmul.bf16.gmra.mxu0 %v900
    %v1673 = vpop.f32.mrf.mxu0
    %v1674 = vadd.f32 0.0, %v1673
    %v1675 = vpop.f32.mrf.mxu0
    %v1676 = vadd.f32 0.0, %v1675
    %1677 = vmatmul.bf16.gmra.mxu0 %v903
    %v1678 = vpop.f32.mrf.mxu0
    %v1679 = vadd.f32 0.0, %v1678
    %v1680 = vpop.f32.mrf.mxu0
    %v1681 = vadd.f32 0.0, %v1680
    %1682 = vmatmul.bf16.gmra.mxu0 %v906
    %v1683 = vpop.f32.mrf.mxu0
    %v1684 = vadd.f32 0.0, %v1683
    %v1685 = vpop.f32.mrf.mxu0
    %v1686 = vadd.f32 0.0, %v1685
    %1687 = vmatmul.bf16.gmra.mxu0 %v909
    %v1688 = vpop.f32.mrf.mxu0
    %v1689 = vadd.f32 0.0, %v1688
    %v1690 = vpop.f32.mrf.mxu0
    %v1691 = vadd.f32 0.0, %v1690
    %1692 = vmatmul.bf16.gmra.mxu0 %v912
    %v1693 = vpop.f32.mrf.mxu0
    %v1694 = vadd.f32 0.0, %v1693
    %v1695 = vpop.f32.mrf.mxu0
    %v1696 = vadd.f32 0.0, %v1695
    %1697 = vmatmul.bf16.gmra.mxu0 %v915
    %v1698 = vpop.f32.mrf.mxu0
    %v1699 = vadd.f32 0.0, %v1698
    %v1700 = vpop.f32.mrf.mxu0
    %v1701 = vadd.f32 0.0, %v1700
    %1702 = vmatmul.bf16.gmra.mxu0 %v918
    %v1703 = vpop.f32.mrf.mxu0
    %v1704 = vadd.f32 0.0, %v1703
    %v1705 = vpop.f32.mrf.mxu0
    %v1706 = vadd.f32 0.0, %v1705
    %1707 = vmatmul.bf16.gmra.mxu0 %v921
    %v1708 = vpop.f32.mrf.mxu0
    %v1709 = vadd.f32 0.0, %v1708
    %v1710 = vpop.f32.mrf.mxu0
    %v1711 = vadd.f32 0.0, %v1710
    %1712 = vmatmul.bf16.gmra.mxu0 %v924
    %v1713 = vpop.f32.mrf.mxu0
    %v1714 = vadd.f32 0.0, %v1713
    %v1715 = vpop.f32.mrf.mxu0
    %v1716 = vadd.f32 0.0, %v1715
    %1717 = vmatmul.bf16.gmra.mxu0 %v927
    %v1718 = vpop.f32.mrf.mxu0
    %v1719 = vadd.f32 0.0, %v1718
    %v1720 = vpop.f32.mrf.mxu0
    %v1721 = vadd.f32 0.0, %v1720
    %1722 = vmatmul.bf16.gmra.mxu0 %v930
    %v1723 = vpop.f32.mrf.mxu0
    %v1724 = vadd.f32 0.0, %v1723
    %v1725 = vpop.f32.mrf.mxu0
    %v1726 = vadd.f32 0.0, %v1725
    %1727 = vmatmul.bf16.gmra.mxu0 %v933
    %v1728 = vpop.f32.mrf.mxu0
    %v1729 = vadd.f32 0.0, %v1728
    %v1730 = vpop.f32.mrf.mxu0
    %v1731 = vadd.f32 0.0, %v1730
    %1732 = vmatmul.bf16.gmra.mxu0 %v936
    %v1733 = vpop.f32.mrf.mxu0
    %v1734 = vadd.f32 0.0, %v1733
    %v1735 = vpop.f32.mrf.mxu0
    %v1736 = vadd.f32 0.0, %v1735
    %1737 = vmatmul.bf16.gmra.mxu0 %v939
    %v1738 = vpop.f32.mrf.mxu0
    %v1739 = vadd.f32 0.0, %v1738
    %v1740 = vpop.f32.mrf.mxu0
    %v1741 = vadd.f32 0.0, %v1740
    %1742 = vmatmul.bf16.gmra.mxu0 %v942
    %v1743 = vpop.f32.mrf.mxu0
    %v1744 = vadd.f32 0.0, %v1743
    %v1745 = vpop.f32.mrf.mxu0
    %v1746 = vadd.f32 0.0, %v1745
    %1747 = vmatmul.bf16.gmra.mxu0 %v945
    %v1748 = vpop.f32.mrf.mxu0
    %v1749 = vadd.f32 0.0, %v1748
    %v1750 = vpop.f32.mrf.mxu0
    %v1751 = vadd.f32 0.0, %v1750
    %1752 = vmatmul.bf16.gmra.mxu0 %v948
    %v1753 = vpop.f32.mrf.mxu0
    %v1754 = vadd.f32 0.0, %v1753
    %v1755 = vpop.f32.mrf.mxu0
    %v1756 = vadd.f32 0.0, %v1755
    %1757 = vmatmul.bf16.gmra.mxu0 %v951
    %v1758 = vpop.f32.mrf.mxu0
    %v1759 = vadd.f32 0.0, %v1758
    %v1760 = vpop.f32.mrf.mxu0
    %v1761 = vadd.f32 0.0, %v1760
    %1762 = vmatmul.bf16.gmra.mxu0 %v954
    %v1763 = vpop.f32.mrf.mxu0
    %v1764 = vadd.f32 0.0, %v1763
    %v1765 = vpop.f32.mrf.mxu0
    %v1766 = vadd.f32 0.0, %v1765
    %1767 = vmatmul.bf16.gmra.mxu0 %v957
    %v1768 = vpop.f32.mrf.mxu0
    %v1769 = vadd.f32 0.0, %v1768
    %v1770 = vpop.f32.mrf.mxu0
    %v1771 = vadd.f32 0.0, %v1770
    %1772 = vmatmul.bf16.gmra.mxu0 %v960
    %v1773 = vpop.f32.mrf.mxu0
    %v1774 = vadd.f32 0.0, %v1773
    %v1775 = vpop.f32.mrf.mxu0
    %v1776 = vadd.f32 0.0, %v1775
    %1777 = vmatmul.bf16.gmra.mxu0 %v963
    %v1778 = vpop.f32.mrf.mxu0
    %v1779 = vadd.f32 0.0, %v1778
    %v1780 = vpop.f32.mrf.mxu0
    %v1781 = vadd.f32 0.0, %v1780
    %1782 = vmatmul.bf16.gmra.mxu0 %v966
    %v1783 = vpop.f32.mrf.mxu0
    %v1784 = vadd.f32 0.0, %v1783
    %v1785 = vpop.f32.mrf.mxu0
    %v1786 = vadd.f32 0.0, %v1785
    %1787 = vmatmul.bf16.gmra.mxu0 %v969
    %v1788 = vpop.f32.mrf.mxu0
    %v1789 = vadd.f32 0.0, %v1788
    %v1790 = vpop.f32.mrf.mxu0
    %v1791 = vadd.f32 0.0, %v1790
    %1792 = vmatmul.bf16.gmra.mxu0 %v972
    %v1793 = vpop.f32.mrf.mxu0
    %v1794 = vadd.f32 0.0, %v1793
    %v1795 = vpop.f32.mrf.mxu0
    %v1796 = vadd.f32 0.0, %v1795
    %1797 = vmatmul.bf16.gmra.mxu0 %v975
    %v1798 = vpop.f32.mrf.mxu0
    %v1799 = vadd.f32 0.0, %v1798
    %v1800 = vpop.f32.mrf.mxu0
    %v1801 = vadd.f32 0.0, %v1800
    %1802 = vmatmul.bf16.gmra.mxu0 %v978
    %v1803 = vpop.f32.mrf.mxu0
    %v1804 = vadd.f32 0.0, %v1803
    %v1805 = vpop.f32.mrf.mxu0
    %v1806 = vadd.f32 0.0, %v1805
    %1807 = vmatmul.bf16.gmra.mxu0 %v981
    %v1808 = vpop.f32.mrf.mxu0
    %v1809 = vadd.f32 0.0, %v1808
    %v1810 = vpop.f32.mrf.mxu0
    %v1811 = vadd.f32 0.0, %v1810
    %1812 = vdwg.mxu0
    %v1813 = vmul.f32 %v1634, %v1172
    %v1814 = vmul.f32 %v1636, %v1172
    %v1815 = vmul.f32 %v1639, %v1172
    %v1816 = vmul.f32 %v1641, %v1172
    %v1817 = vmul.f32 %v1644, %v1172
    %v1818 = vmul.f32 %v1646, %v1172
    %v1819 = vmul.f32 %v1649, %v1172
    %v1820 = vmul.f32 %v1651, %v1172
    %v1821 = vmul.f32 %v1654, %v1173
    %v1822 = vmul.f32 %v1656, %v1173
    %v1823 = vmul.f32 %v1659, %v1173
    %v1824 = vmul.f32 %v1661, %v1173
    %v1825 = vmul.f32 %v1664, %v1173
    %v1826 = vmul.f32 %v1666, %v1173
    %v1827 = vmul.f32 %v1669, %v1173
    %v1828 = vmul.f32 %v1671, %v1173
    %v1829 = vmul.f32 %v1674, %v1174
    %v1830 = vmul.f32 %v1676, %v1174
    %v1831 = vmul.f32 %v1679, %v1174
    %v1832 = vmul.f32 %v1681, %v1174
    %v1833 = vmul.f32 %v1684, %v1174
    %v1834 = vmul.f32 %v1686, %v1174
    %v1835 = vmul.f32 %v1689, %v1174
    %v1836 = vmul.f32 %v1691, %v1174
    %v1837 = vmul.f32 %v1694, %v1175
    %v1838 = vmul.f32 %v1696, %v1175
    %v1839 = vmul.f32 %v1699, %v1175
    %v1840 = vmul.f32 %v1701, %v1175
    %v1841 = vmul.f32 %v1704, %v1175
    %v1842 = vmul.f32 %v1706, %v1175
    %v1843 = vmul.f32 %v1709, %v1175
    %v1844 = vmul.f32 %v1711, %v1175
    %v1845 = vmul.f32 %v1714, %v1176
    %v1846 = vmul.f32 %v1716, %v1176
    %v1847 = vmul.f32 %v1719, %v1176
    %v1848 = vmul.f32 %v1721, %v1176
    %v1849 = vmul.f32 %v1724, %v1176
    %v1850 = vmul.f32 %v1726, %v1176
    %v1851 = vmul.f32 %v1729, %v1176
    %v1852 = vmul.f32 %v1731, %v1176
    %v1853 = vmul.f32 %v1734, %v1177
    %v1854 = vmul.f32 %v1736, %v1177
    %v1855 = vmul.f32 %v1739, %v1177
    %v1856 = vmul.f32 %v1741, %v1177
    %v1857 = vmul.f32 %v1744, %v1177
    %v1858 = vmul.f32 %v1746, %v1177
    %v1859 = vmul.f32 %v1749, %v1177
    %v1860 = vmul.f32 %v1751, %v1177
    %v1861 = vmul.f32 %v1754, %v1178
    %v1862 = vmul.f32 %v1756, %v1178
    %v1863 = vmul.f32 %v1759, %v1178
    %v1864 = vmul.f32 %v1761, %v1178
    %v1865 = vmul.f32 %v1764, %v1178
    %v1866 = vmul.f32 %v1766, %v1178
    %v1867 = vmul.f32 %v1769, %v1178
    %v1868 = vmul.f32 %v1771, %v1178
    %v1869 = vmul.f32 %v1774, %v1179
    %v1870 = vmul.f32 %v1776, %v1179
    %v1871 = vmul.f32 %v1779, %v1179
    %v1872 = vmul.f32 %v1781, %v1179
    %v1873 = vmul.f32 %v1784, %v1179
    %v1874 = vmul.f32 %v1786, %v1179
    %v1875 = vmul.f32 %v1789, %v1179
    %v1876 = vmul.f32 %v1791, %v1179
    %v1877 = vmul.f32 %v1794, %v1180
    %v1878 = vmul.f32 %v1796, %v1180
    %v1879 = vmul.f32 %v1799, %v1180
    %v1880 = vmul.f32 %v1801, %v1180
    %v1881 = vmul.f32 %v1804, %v1180
    %v1882 = vmul.f32 %v1806, %v1180
    %v1883 = vmul.f32 %v1809, %v1180
    %v1884 = vmul.f32 %v1811, %v1180
    %v1885 = vsel %vm336, %v1813, 0.0
    %v1886 = vsel %vm336, %v1821, 0.0
    %v1887 = vadd.f32 %v1885, %v1886
    %v1888 = vsel %vm336, %v1829, 0.0
    %v1889 = vadd.f32 %v1887, %v1888
    %v1890 = vsel %vm336, %v1837, 0.0
    %v1891 = vadd.f32 %v1889, %v1890
    %v1892 = vsel %vm336, %v1845, 0.0
    %v1893 = vadd.f32 %v1891, %v1892
    %v1894 = vsel %vm336, %v1853, 0.0
    %v1895 = vadd.f32 %v1893, %v1894
    %v1896 = vsel %vm336, %v1861, 0.0
    %v1897 = vadd.f32 %v1895, %v1896
    %v1898 = vsel %vm336, %v1869, 0.0
    %v1899 = vadd.f32 %v1897, %v1898
    %v1900 = vsel %vm336, %v1877, 0.0
    %v1901 = vadd.f32 %v1899, %v1900
    %v1902 = vsel %vm336, %v1814, 0.0
    %v1903 = vsel %vm336, %v1822, 0.0
    %v1904 = vadd.f32 %v1902, %v1903
    %v1905 = vsel %vm336, %v1830, 0.0
    %v1906 = vadd.f32 %v1904, %v1905
    %v1907 = vsel %vm336, %v1838, 0.0
    %v1908 = vadd.f32 %v1906, %v1907
    %v1909 = vsel %vm336, %v1846, 0.0
    %v1910 = vadd.f32 %v1908, %v1909
    %v1911 = vsel %vm336, %v1854, 0.0
    %v1912 = vadd.f32 %v1910, %v1911
    %v1913 = vsel %vm336, %v1862, 0.0
    %v1914 = vadd.f32 %v1912, %v1913
    %v1915 = vsel %vm336, %v1870, 0.0
    %v1916 = vadd.f32 %v1914, %v1915
    %v1917 = vsel %vm336, %v1878, 0.0
    %v1918 = vadd.f32 %v1916, %v1917
    %v1919 = vsel %vm336, %v1815, 0.0
    %v1920 = vsel %vm336, %v1823, 0.0
    %v1921 = vadd.f32 %v1919, %v1920
    %v1922 = vsel %vm336, %v1831, 0.0
    %v1923 = vadd.f32 %v1921, %v1922
    %v1924 = vsel %vm336, %v1839, 0.0
    %v1925 = vadd.f32 %v1923, %v1924
    %v1926 = vsel %vm336, %v1847, 0.0
    %v1927 = vadd.f32 %v1925, %v1926
    %v1928 = vsel %vm336, %v1855, 0.0
    %v1929 = vadd.f32 %v1927, %v1928
    %v1930 = vsel %vm336, %v1863, 0.0
    %v1931 = vadd.f32 %v1929, %v1930
    %v1932 = vsel %vm336, %v1871, 0.0
    %v1933 = vadd.f32 %v1931, %v1932
    %v1934 = vsel %vm336, %v1879, 0.0
    %v1935 = vadd.f32 %v1933, %v1934
    %v1936 = vsel %vm336, %v1816, 0.0
    %v1937 = vsel %vm336, %v1824, 0.0
    %v1938 = vadd.f32 %v1936, %v1937
    %v1939 = vsel %vm336, %v1832, 0.0
    %v1940 = vadd.f32 %v1938, %v1939
    %v1941 = vsel %vm336, %v1840, 0.0
    %v1942 = vadd.f32 %v1940, %v1941
    %v1943 = vsel %vm336, %v1848, 0.0
    %v1944 = vadd.f32 %v1942, %v1943
    %v1945 = vsel %vm336, %v1856, 0.0
    %v1946 = vadd.f32 %v1944, %v1945
    %v1947 = vsel %vm336, %v1864, 0.0
    %v1948 = vadd.f32 %v1946, %v1947
    %v1949 = vsel %vm336, %v1872, 0.0
    %v1950 = vadd.f32 %v1948, %v1949
    %v1951 = vsel %vm336, %v1880, 0.0
    %v1952 = vadd.f32 %v1950, %v1951
    %v1953 = vsel %vm336, %v1817, 0.0
    %v1954 = vsel %vm336, %v1825, 0.0
    %v1955 = vadd.f32 %v1953, %v1954
    %v1956 = vsel %vm336, %v1833, 0.0
    %v1957 = vadd.f32 %v1955, %v1956
    %v1958 = vsel %vm336, %v1841, 0.0
    %v1959 = vadd.f32 %v1957, %v1958
    %v1960 = vsel %vm336, %v1849, 0.0
    %v1961 = vadd.f32 %v1959, %v1960
    %v1962 = vsel %vm336, %v1857, 0.0
    %v1963 = vadd.f32 %v1961, %v1962
    %v1964 = vsel %vm336, %v1865, 0.0
    %v1965 = vadd.f32 %v1963, %v1964
    %v1966 = vsel %vm336, %v1873, 0.0
    %v1967 = vadd.f32 %v1965, %v1966
    %v1968 = vsel %vm336, %v1881, 0.0
    %v1969 = vadd.f32 %v1967, %v1968
    %v1970 = vsel %vm336, %v1818, 0.0
    %v1971 = vsel %vm336, %v1826, 0.0
    %v1972 = vadd.f32 %v1970, %v1971
    %v1973 = vsel %vm336, %v1834, 0.0
    %v1974 = vadd.f32 %v1972, %v1973
    %v1975 = vsel %vm336, %v1842, 0.0
    %v1976 = vadd.f32 %v1974, %v1975
    %v1977 = vsel %vm336, %v1850, 0.0
    %v1978 = vadd.f32 %v1976, %v1977
    %v1979 = vsel %vm336, %v1858, 0.0
    %v1980 = vadd.f32 %v1978, %v1979
    %v1981 = vsel %vm336, %v1866, 0.0
    %v1982 = vadd.f32 %v1980, %v1981
    %v1983 = vsel %vm336, %v1874, 0.0
    %v1984 = vadd.f32 %v1982, %v1983
    %v1985 = vsel %vm336, %v1882, 0.0
    %v1986 = vadd.f32 %v1984, %v1985
    %v1987 = vsel %vm336, %v1819, 0.0
    %v1988 = vsel %vm336, %v1827, 0.0
    %v1989 = vadd.f32 %v1987, %v1988
    %v1990 = vsel %vm336, %v1835, 0.0
    %v1991 = vadd.f32 %v1989, %v1990
    %v1992 = vsel %vm336, %v1843, 0.0
    %v1993 = vadd.f32 %v1991, %v1992
    %v1994 = vsel %vm336, %v1851, 0.0
    %v1995 = vadd.f32 %v1993, %v1994
    %v1996 = vsel %vm336, %v1859, 0.0
    %v1997 = vadd.f32 %v1995, %v1996
    %v1998 = vsel %vm336, %v1867, 0.0
    %v1999 = vadd.f32 %v1997, %v1998
    %v2000 = vsel %vm336, %v1875, 0.0
    %v2001 = vadd.f32 %v1999, %v2000
    %v2002 = vsel %vm336, %v1883, 0.0
    %v2003 = vadd.f32 %v2001, %v2002
    %v2004 = vsel %vm336, %v1820, 0.0
    %v2005 = vsel %vm336, %v1828, 0.0
    %v2006 = vadd.f32 %v2004, %v2005
    %v2007 = vsel %vm336, %v1836, 0.0
    %v2008 = vadd.f32 %v2006, %v2007
    %v2009 = vsel %vm336, %v1844, 0.0
    %v2010 = vadd.f32 %v2008, %v2009
    %v2011 = vsel %vm336, %v1852, 0.0
    %v2012 = vadd.f32 %v2010, %v2011
    %v2013 = vsel %vm336, %v1860, 0.0
    %v2014 = vadd.f32 %v2012, %v2013
    %v2015 = vsel %vm336, %v1868, 0.0
    %v2016 = vadd.f32 %v2014, %v2015
    %v2017 = vsel %vm336, %v1876, 0.0
    %v2018 = vadd.f32 %v2016, %v2017
    %v2019 = vsel %vm336, %v1884, 0.0
    %v2020 = vadd.f32 %v2018, %v2019
    %v2022 = vsel %vm336, %v1608, 0
    %v2025 = vsel %vm336, %v1609, 0
    %v2028 = vsel %vm336, %v1610, 0
    %v2031 = vsel %vm336, %v1611, 0
    %2033 = vmatpush.bf16.msra.mxu0 0
    %2034 = vmatpush.bf16.msra.mxu0 0
    %2035 = vmatpush.bf16.msra.mxu0 0
    %2036 = vmatpush.bf16.msra.mxu0 0
    %2037 = vmatpush.bf16.msra.mxu0 %v1619
    %2038 = vmatpush.bf16.msra.mxu0 %v1617
    %2039 = vmatpush.bf16.msra.mxu0 %v1615
    %2040 = vmatpush.bf16.msra.mxu0 %v1613
    %2041 = vmatmul.bf16.gmra.mxu0 %v2022
    %v2042 = vpop.f32.mrf.mxu0
    %v2043 = vadd.f32 %v1901, %v2042
    %v2044 = vpop.f32.mrf.mxu0
    %v2045 = vadd.f32 %v1918, %v2044
    %2046 = vmatmul.bf16.gmra.mxu0 %v2025
    %v2047 = vpop.f32.mrf.mxu0
    %v2048 = vadd.f32 %v1935, %v2047
    %v2049 = vpop.f32.mrf.mxu0
    %v2050 = vadd.f32 %v1952, %v2049
    %2051 = vmatmul.bf16.gmra.mxu0 %v2028
    %v2052 = vpop.f32.mrf.mxu0
    %v2053 = vadd.f32 %v1969, %v2052
    %v2054 = vpop.f32.mrf.mxu0
    %v2055 = vadd.f32 %v1986, %v2054
    %2056 = vmatmul.bf16.gmra.mxu0 %v2031
    %v2057 = vpop.f32.mrf.mxu0
    %v2058 = vadd.f32 %v2003, %v2057
    %v2059 = vpop.f32.mrf.mxu0
    %v2060 = vadd.f32 %v2020, %v2059
    %2061 = vdwg.mxu0
    %v2062 = vld [vmem:[%s1 + $0x60] sm:$0xf]
    %v2063 = vld [vmem:[%s1 + $0x64] sm:$0xf]
    %v2064 = vld [vmem:[%s1 + $0x68] sm:$0xf]
    %v2065 = vld [vmem:[%s1 + $0x6c] sm:$0xf]
    %v2066 = vld [vmem:[%s1 + $0x70] sm:$0xf]
    %v2067 = vld [vmem:[%s1 + $0x74] sm:$0xf]
    %v2068 = vld [vmem:[%s1 + $0x78] sm:$0xf]
    %v2069 = vld [vmem:[%s1 + $0x7c] sm:$0xf]
    %v2070 = vpack.c.bf16 %v1422, %v1420
    %v2071 = vpack.c.bf16 %v1427, %v1425
    %v2072 = vpack.c.bf16 %v1432, %v1430
    %v2073 = vpack.c.bf16 %v1437, %v1435
    %v2074 = vpack.c.bf16 %v2045, %v2043
    %v2075 = vpack.c.bf16 %v2050, %v2048
    %v2076 = vpack.c.bf16 %v2055, %v2053
    %v2077 = vpack.c.bf16 %v2060, %v2058
    %v2086 = vunpack.c.l.b16 %v2062
    %v2087 = vunpack.c.l.b16 %v2063
    %v2088 = vunpack.c.l.b16 %v2064
    %v2089 = vunpack.c.l.b16 %v2065
    %v2090 = vunpack.c.l.b16 %v2066
    %v2091 = vunpack.c.l.b16 %v2067
    %v2092 = vunpack.c.l.b16 %v2068
    %v2093 = vunpack.c.l.b16 %v2069
    %v2094 = vpack.c.b16 %v2087, %v2086
    %v2095 = vpack.c.b16 %v2089, %v2088
    %v2096 = vpack.c.b16 %v2091, %v2090
    %v2097 = vpack.c.b16 %v2093, %v2092
    %v2103 = vsel %vm336, %v2070, 0
    %v2106 = vsel %vm336, %v2071, 0
    %v2109 = vsel %vm336, %v2072, 0
    %v2112 = vsel %vm336, %v2073, 0
    %v2115 = vsel %vm336, %v2074, 0
    %v2118 = vsel %vm336, %v2075, 0
    %v2121 = vsel %vm336, %v2076, 0
    %v2124 = vsel %vm336, %v2077, 0
    %2126 = vmatpush.bf16.msra.mxu0 0
    %2127 = vmatpush.bf16.msra.mxu0 0
    %2128 = vmatpush.bf16.msra.mxu0 0
    %2129 = vmatpush.bf16.msra.mxu0 0
    %2130 = vmatpush.bf16.msra.mxu0 %v2097
    %2131 = vmatpush.bf16.msra.mxu0 %v2096
    %2132 = vmatpush.bf16.msra.mxu0 %v2095
    %2133 = vmatpush.bf16.msra.mxu0 %v2094
    %2134 = vmatmul.bf16.gmra.mxu0 %v2103
    %v2135 = vpop.f32.mrf.mxu0
    %v2136 = vadd.f32 0.0, %v2135
    %v2137 = vpop.f32.mrf.mxu0
    %v2138 = vadd.f32 0.0, %v2137
    %2139 = vmatmul.bf16.gmra.mxu0 %v2106
    %v2140 = vpop.f32.mrf.mxu0
    %v2141 = vadd.f32 0.0, %v2140
    %v2142 = vpop.f32.mrf.mxu0
    %v2143 = vadd.f32 0.0, %v2142
    %2144 = vmatmul.bf16.gmra.mxu0 %v2109
    %v2145 = vpop.f32.mrf.mxu0
    %v2146 = vadd.f32 0.0, %v2145
    %v2147 = vpop.f32.mrf.mxu0
    %v2148 = vadd.f32 0.0, %v2147
    %2149 = vmatmul.bf16.gmra.mxu0 %v2112
    %v2150 = vpop.f32.mrf.mxu0
    %v2151 = vadd.f32 0.0, %v2150
    %v2152 = vpop.f32.mrf.mxu0
    %v2153 = vadd.f32 0.0, %v2152
    %2154 = vmatmul.bf16.gmra.mxu0 %v2115
    %v2155 = vpop.f32.mrf.mxu0
    %v2156 = vadd.f32 0.0, %v2155
    %v2157 = vpop.f32.mrf.mxu0
    %v2158 = vadd.f32 0.0, %v2157
    %2159 = vmatmul.bf16.gmra.mxu0 %v2118
    %v2160 = vpop.f32.mrf.mxu0
    %v2161 = vadd.f32 0.0, %v2160
    %v2162 = vpop.f32.mrf.mxu0
    %v2163 = vadd.f32 0.0, %v2162
    %2164 = vmatmul.bf16.gmra.mxu0 %v2121
    %v2165 = vpop.f32.mrf.mxu0
    %v2166 = vadd.f32 0.0, %v2165
    %v2167 = vpop.f32.mrf.mxu0
    %v2168 = vadd.f32 0.0, %v2167
    %2169 = vmatmul.bf16.gmra.mxu0 %v2124
    %v2170 = vpop.f32.mrf.mxu0
    %v2171 = vadd.f32 0.0, %v2170
    %v2172 = vpop.f32.mrf.mxu0
    %v2173 = vadd.f32 0.0, %v2172
    %2174 = vdwg.mxu0
    %2191 = vrot.lane.b32.xlu0 %v2136, 64
    %v2192 = vpop.permute.xlu0 %2191
    %2193 = vrot.lane.b32.xlu0 %v2138, 64
    %v2194 = vpop.permute.xlu0 %2193
    %2195 = vrot.lane.b32.xlu0 %v2141, 64
    %v2196 = vpop.permute.xlu0 %2195
    %2197 = vrot.lane.b32.xlu0 %v2143, 64
    %v2198 = vpop.permute.xlu0 %2197
    %2199 = vrot.lane.b32.xlu0 %v2146, 64
    %v2200 = vpop.permute.xlu0 %2199
    %2201 = vrot.lane.b32.xlu0 %v2148, 64
    %v2202 = vpop.permute.xlu0 %2201
    %2203 = vrot.lane.b32.xlu0 %v2151, 64
    %v2204 = vpop.permute.xlu0 %2203
    %2205 = vrot.lane.b32.xlu0 %v2153, 64
    %v2206 = vpop.permute.xlu0 %2205
    %2207 = vrot.lane.b32.xlu0 %v2156, 64
    %v2208 = vpop.permute.xlu0 %2207
    %2209 = vrot.lane.b32.xlu0 %v2158, 64
    %v2210 = vpop.permute.xlu0 %2209
    %2211 = vrot.lane.b32.xlu0 %v2161, 64
    %v2212 = vpop.permute.xlu0 %2211
    %2213 = vrot.lane.b32.xlu0 %v2163, 64
    %v2214 = vpop.permute.xlu0 %2213
    %2215 = vrot.lane.b32.xlu0 %v2166, 64
    %v2216 = vpop.permute.xlu0 %2215
    %2217 = vrot.lane.b32.xlu0 %v2168, 64
    %v2218 = vpop.permute.xlu0 %2217
    %2219 = vrot.lane.b32.xlu0 %v2171, 64
    %v2220 = vpop.permute.xlu0 %2219
    %2221 = vrot.lane.b32.xlu0 %v2173, 64
    %v2222 = vpop.permute.xlu0 %2221
    %v2239 = vadd.f32 %v254, %v2192
    %v2240 = vadd.f32 %v255, %v2194
    %v2241 = vadd.f32 %v256, %v2196
    %v2242 = vadd.f32 %v257, %v2198
    %v2243 = vadd.f32 %v258, %v2200
    %v2244 = vadd.f32 %v259, %v2202
    %v2245 = vadd.f32 %v260, %v2204
    %v2246 = vadd.f32 %v261, %v2206
    %v2247 = vadd.f32 %v262, %v2208
    %v2248 = vadd.f32 %v263, %v2210
    %v2249 = vadd.f32 %v264, %v2212
    %v2250 = vadd.f32 %v265, %v2214
    %v2251 = vadd.f32 %v266, %v2216
    %v2252 = vadd.f32 %v267, %v2218
    %v2253 = vadd.f32 %v268, %v2220
    %v2254 = vadd.f32 %v269, %v2222
    %v2255 = vld [vmem:[%s2 + $0x2] sm:$0x1]
    %v2256 = vperm.slane %v2255, 0
    %2258 = vrot.lane.b32.xlu0 %v2256, 64
    %v2259 = vpop.permute.xlu0 %2258
    %v2261 = vadd.f32 %v2239, %v2259
    %v2262 = vadd.f32 %v2240, %v2259
    %v2263 = vadd.f32 %v2241, %v2259
    %v2264 = vadd.f32 %v2242, %v2259
    %v2265 = vadd.f32 %v2243, %v2259
    %v2266 = vadd.f32 %v2244, %v2259
    %v2267 = vadd.f32 %v2245, %v2259
    %v2268 = vadd.f32 %v2246, %v2259
    %v2269 = vadd.f32 %v2247, %v2259
    %v2270 = vadd.f32 %v2248, %v2259
    %v2271 = vadd.f32 %v2249, %v2259
    %v2272 = vadd.f32 %v2250, %v2259
    %v2273 = vadd.f32 %v2251, %v2259
    %v2274 = vadd.f32 %v2252, %v2259
    %v2275 = vadd.f32 %v2253, %v2259
    %v2276 = vadd.f32 %v2254, %v2259
    %v2277 = vld [vmem:[%s1 + $0x80] sm:$0xf]
    %v2278 = vld [vmem:[%s1 + $0x84] sm:$0xf]
    %v2279 = vld [vmem:[%s1 + $0x88] sm:$0xf]
    %v2280 = vld [vmem:[%s1 + $0x8c] sm:$0xf]
    %v2281 = vld [vmem:[%s1 + $0x90] sm:$0xf]
    %v2282 = vld [vmem:[%s1 + $0x94] sm:$0xf]
    %v2283 = vld [vmem:[%s1 + $0x98] sm:$0xf]
    %v2284 = vld [vmem:[%s1 + $0x9c] sm:$0xf]
    %v2285 = vpack.c.bf16 %v2262, %v2261
    %v2286 = vpack.c.bf16 %v2264, %v2263
    %v2287 = vpack.c.bf16 %v2266, %v2265
    %v2288 = vpack.c.bf16 %v2268, %v2267
    %v2289 = vpack.c.bf16 %v2270, %v2269
    %v2290 = vpack.c.bf16 %v2272, %v2271
    %v2291 = vpack.c.bf16 %v2274, %v2273
    %v2292 = vpack.c.bf16 %v2276, %v2275
    %v2293 = vld [vmem:[%s2 + $0x3] sm:$0x1]
    %v2294 = vperm.slane %v2293, 0
    %2303 = vrot.lane.b32.xlu0 %v2285, 64
    %v2304 = vpop.permute.xlu0 %2303
    %2305 = vrot.lane.b32.xlu0 %v2286, 64
    %v2306 = vpop.permute.xlu0 %2305
    %2307 = vrot.lane.b32.xlu0 %v2287, 64
    %v2308 = vpop.permute.xlu0 %2307
    %2309 = vrot.lane.b32.xlu0 %v2288, 64
    %v2310 = vpop.permute.xlu0 %2309
    %2311 = vrot.lane.b32.xlu0 %v2289, 64
    %v2312 = vpop.permute.xlu0 %2311
    %2313 = vrot.lane.b32.xlu0 %v2290, 64
    %v2314 = vpop.permute.xlu0 %2313
    %2315 = vrot.lane.b32.xlu0 %v2291, 64
    %v2316 = vpop.permute.xlu0 %2315
    %2317 = vrot.lane.b32.xlu0 %v2292, 64
    %v2318 = vpop.permute.xlu0 %2317
    %v2327 = vunpack.c.l.b16 %v2277
    %v2328 = vunpack.c.l.b16 %v2278
    %v2329 = vunpack.c.l.b16 %v2279
    %v2330 = vunpack.c.l.b16 %v2280
    %v2331 = vunpack.c.l.b16 %v2281
    %v2332 = vunpack.c.l.b16 %v2282
    %v2333 = vunpack.c.l.b16 %v2283
    %v2334 = vunpack.c.l.b16 %v2284
    %v2335 = vpack.c.b16 %v2328, %v2327
    %v2336 = vpack.c.b16 %v2330, %v2329
    %v2337 = vpack.c.b16 %v2332, %v2331
    %v2338 = vpack.c.b16 %v2334, %v2333
    %v2344 = vsel %vm336, %v2304, 0
    %v2347 = vsel %vm336, %v2306, 0
    %v2350 = vsel %vm336, %v2308, 0
    %v2353 = vsel %vm336, %v2310, 0
    %v2356 = vsel %vm336, %v2312, 0
    %v2359 = vsel %vm336, %v2314, 0
    %v2362 = vsel %vm336, %v2316, 0
    %v2365 = vsel %vm336, %v2318, 0
    %2367 = vmatpush.bf16.msra.mxu0 0
    %2368 = vmatpush.bf16.msra.mxu0 0
    %2369 = vmatpush.bf16.msra.mxu0 0
    %2370 = vmatpush.bf16.msra.mxu0 0
    %2371 = vmatpush.bf16.msra.mxu0 %v2338
    %2372 = vmatpush.bf16.msra.mxu0 %v2337
    %2373 = vmatpush.bf16.msra.mxu0 %v2336
    %2374 = vmatpush.bf16.msra.mxu0 %v2335
    %2375 = vmatmul.bf16.gmra.mxu0 %v2344
    %v2376 = vpop.f32.mrf.mxu0
    %v2377 = vadd.f32 %v2294, %v2376
    %v2378 = vpop.f32.mrf.mxu0
    %v2379 = vadd.f32 %v2294, %v2378
    %2380 = vmatmul.bf16.gmra.mxu0 %v2347
    %v2381 = vpop.f32.mrf.mxu0
    %v2382 = vadd.f32 %v2294, %v2381
    %v2383 = vpop.f32.mrf.mxu0
    %v2384 = vadd.f32 %v2294, %v2383
    %2385 = vmatmul.bf16.gmra.mxu0 %v2350
    %v2386 = vpop.f32.mrf.mxu0
    %v2387 = vadd.f32 %v2294, %v2386
    %v2388 = vpop.f32.mrf.mxu0
    %v2389 = vadd.f32 %v2294, %v2388
    %2390 = vmatmul.bf16.gmra.mxu0 %v2353
    %v2391 = vpop.f32.mrf.mxu0
    %v2392 = vadd.f32 %v2294, %v2391
    %v2393 = vpop.f32.mrf.mxu0
    %v2394 = vadd.f32 %v2294, %v2393
    %2395 = vmatmul.bf16.gmra.mxu0 %v2356
    %v2396 = vpop.f32.mrf.mxu0
    %v2397 = vadd.f32 %v2294, %v2396
    %v2398 = vpop.f32.mrf.mxu0
    %v2399 = vadd.f32 %v2294, %v2398
    %2400 = vmatmul.bf16.gmra.mxu0 %v2359
    %v2401 = vpop.f32.mrf.mxu0
    %v2402 = vadd.f32 %v2294, %v2401
    %v2403 = vpop.f32.mrf.mxu0
    %v2404 = vadd.f32 %v2294, %v2403
    %2405 = vmatmul.bf16.gmra.mxu0 %v2362
    %v2406 = vpop.f32.mrf.mxu0
    %v2407 = vadd.f32 %v2294, %v2406
    %v2408 = vpop.f32.mrf.mxu0
    %v2409 = vadd.f32 %v2294, %v2408
    %2410 = vmatmul.bf16.gmra.mxu0 %v2365
    %v2411 = vpop.f32.mrf.mxu0
    %v2412 = vadd.f32 %v2294, %v2411
    %v2413 = vpop.f32.mrf.mxu0
    %v2414 = vadd.f32 %v2294, %v2413
    %2415 = vdwg.mxu0
    %v2416 = vmax.f32 %v2377, -60.0
    %v2417 = vmax.f32 %v2379, -60.0
    %v2418 = vmax.f32 %v2382, -60.0
    %v2419 = vmax.f32 %v2384, -60.0
    %v2420 = vmax.f32 %v2387, -60.0
    %v2421 = vmax.f32 %v2389, -60.0
    %v2422 = vmax.f32 %v2392, -60.0
    %v2423 = vmax.f32 %v2394, -60.0
    %v2424 = vmax.f32 %v2397, -60.0
    %v2425 = vmax.f32 %v2399, -60.0
    %v2426 = vmax.f32 %v2402, -60.0
    %v2427 = vmax.f32 %v2404, -60.0
    %v2428 = vmax.f32 %v2407, -60.0
    %v2429 = vmax.f32 %v2409, -60.0
    %v2430 = vmax.f32 %v2412, -60.0
    %v2431 = vmax.f32 %v2414, -60.0
    %v2432 = vsub.f32 0.0, %v2416
    %v2433 = vsub.f32 0.0, %v2417
    %v2434 = vsub.f32 0.0, %v2418
    %v2435 = vsub.f32 0.0, %v2419
    %v2436 = vsub.f32 0.0, %v2420
    %v2437 = vsub.f32 0.0, %v2421
    %v2438 = vsub.f32 0.0, %v2422
    %v2439 = vsub.f32 0.0, %v2423
    %v2440 = vsub.f32 0.0, %v2424
    %v2441 = vsub.f32 0.0, %v2425
    %v2442 = vsub.f32 0.0, %v2426
    %v2443 = vsub.f32 0.0, %v2427
    %v2444 = vsub.f32 0.0, %v2428
    %v2445 = vsub.f32 0.0, %v2429
    %v2446 = vsub.f32 0.0, %v2430
    %v2447 = vsub.f32 0.0, %v2431
    %v2448 = vmul.f32 %v2432, 1.442695
    %v2449 = vpow.pop %v2448
    %v2450 = vmul.f32 %v2433, 1.442695
    %v2451 = vpow.pop %v2450
    %v2452 = vmul.f32 %v2434, 1.442695
    %v2453 = vpow.pop %v2452
    %v2454 = vmul.f32 %v2435, 1.442695
    %v2455 = vpow.pop %v2454
    %v2456 = vmul.f32 %v2436, 1.442695
    %v2457 = vpow.pop %v2456
    %v2458 = vmul.f32 %v2437, 1.442695
    %v2459 = vpow.pop %v2458
    %v2460 = vmul.f32 %v2438, 1.442695
    %v2461 = vpow.pop %v2460
    %v2462 = vmul.f32 %v2439, 1.442695
    %v2463 = vpow.pop %v2462
    %v2464 = vmul.f32 %v2440, 1.442695
    %v2465 = vpow.pop %v2464
    %v2466 = vmul.f32 %v2441, 1.442695
    %v2467 = vpow.pop %v2466
    %v2468 = vmul.f32 %v2442, 1.442695
    %v2469 = vpow.pop %v2468
    %v2470 = vmul.f32 %v2443, 1.442695
    %v2471 = vpow.pop %v2470
    %v2472 = vmul.f32 %v2444, 1.442695
    %v2473 = vpow.pop %v2472
    %v2474 = vmul.f32 %v2445, 1.442695
    %v2475 = vpow.pop %v2474
    %v2476 = vmul.f32 %v2446, 1.442695
    %v2477 = vpow.pop %v2476
    %v2478 = vmul.f32 %v2447, 1.442695
    %v2479 = vpow.pop %v2478
    %v2480 = vadd.f32 %v2449, 1.0
    %v2481 = vadd.f32 %v2451, 1.0
    %v2482 = vadd.f32 %v2453, 1.0
    %v2483 = vadd.f32 %v2455, 1.0
    %v2484 = vadd.f32 %v2457, 1.0
    %v2485 = vadd.f32 %v2459, 1.0
    %v2486 = vadd.f32 %v2461, 1.0
    %v2487 = vadd.f32 %v2463, 1.0
    %v2488 = vadd.f32 %v2465, 1.0
    %v2489 = vadd.f32 %v2467, 1.0
    %v2490 = vadd.f32 %v2469, 1.0
    %v2491 = vadd.f32 %v2471, 1.0
    %v2492 = vadd.f32 %v2473, 1.0
    %v2493 = vadd.f32 %v2475, 1.0
    %v2494 = vadd.f32 %v2477, 1.0
    %v2495 = vadd.f32 %v2479, 1.0
    %v2496 = vrcp.pop %v2480
    %v2497 = vrcp.pop %v2481
    %v2498 = vrcp.pop %v2482
    %v2499 = vrcp.pop %v2483
    %v2500 = vrcp.pop %v2484
    %v2501 = vrcp.pop %v2485
    %v2502 = vrcp.pop %v2486
    %v2503 = vrcp.pop %v2487
    %v2504 = vrcp.pop %v2488
    %v2505 = vrcp.pop %v2489
    %v2506 = vrcp.pop %v2490
    %v2507 = vrcp.pop %v2491
    %v2508 = vrcp.pop %v2492
    %v2509 = vrcp.pop %v2493
    %v2510 = vrcp.pop %v2494
    %v2511 = vrcp.pop %v2495
    %v2512 = vmul.f32 %v2377, %v2496
    %v2513 = vmul.f32 %v2379, %v2497
    %v2514 = vmul.f32 %v2382, %v2498
    %v2515 = vmul.f32 %v2384, %v2499
    %v2516 = vmul.f32 %v2387, %v2500
    %v2517 = vmul.f32 %v2389, %v2501
    %v2518 = vmul.f32 %v2392, %v2502
    %v2519 = vmul.f32 %v2394, %v2503
    %v2520 = vmul.f32 %v2397, %v2504
    %v2521 = vmul.f32 %v2399, %v2505
    %v2522 = vmul.f32 %v2402, %v2506
    %v2523 = vmul.f32 %v2404, %v2507
    %v2524 = vmul.f32 %v2407, %v2508
    %v2525 = vmul.f32 %v2409, %v2509
    %v2526 = vmul.f32 %v2412, %v2510
    %v2527 = vmul.f32 %v2414, %v2511
    %v2528 = vld [vmem:[%s1 + $0xa0] sm:$0xf]
    %v2529 = vld [vmem:[%s1 + $0xa4] sm:$0xf]
    %v2530 = vld [vmem:[%s1 + $0xa8] sm:$0xf]
    %v2531 = vld [vmem:[%s1 + $0xac] sm:$0xf]
    %v2532 = vld [vmem:[%s1 + $0xb0] sm:$0xf]
    %v2533 = vld [vmem:[%s1 + $0xb4] sm:$0xf]
    %v2534 = vld [vmem:[%s1 + $0xb8] sm:$0xf]
    %v2535 = vld [vmem:[%s1 + $0xbc] sm:$0xf]
    %v2536 = vld [vmem:[%s1 + $0xc0] sm:$0xf]
    %v2537 = vld [vmem:[%s1 + $0xc4] sm:$0xf]
    %v2538 = vld [vmem:[%s1 + $0xc8] sm:$0xf]
    %v2539 = vld [vmem:[%s1 + $0xcc] sm:$0xf]
    %v2540 = vld [vmem:[%s1 + $0xd0] sm:$0xf]
    %v2541 = vld [vmem:[%s1 + $0xd4] sm:$0xf]
    %v2542 = vld [vmem:[%s1 + $0xd8] sm:$0xf]
    %v2543 = vld [vmem:[%s1 + $0xdc] sm:$0xf]
    %v2544 = vpack.c.bf16 %v2513, %v2512
    %v2545 = vpack.c.bf16 %v2515, %v2514
    %v2546 = vpack.c.bf16 %v2517, %v2516
    %v2547 = vpack.c.bf16 %v2519, %v2518
    %v2548 = vpack.c.bf16 %v2521, %v2520
    %v2549 = vpack.c.bf16 %v2523, %v2522
    %v2550 = vpack.c.bf16 %v2525, %v2524
    %v2551 = vpack.c.bf16 %v2527, %v2526
    %v2568 = vunpack.c.l.b16 %v2528
    %v2569 = vunpack.c.l.b16 %v2529
    %v2570 = vunpack.c.l.b16 %v2530
    %v2571 = vunpack.c.l.b16 %v2531
    %v2572 = vunpack.c.l.b16 %v2532
    %v2573 = vunpack.c.l.b16 %v2533
    %v2574 = vunpack.c.l.b16 %v2534
    %v2575 = vunpack.c.l.b16 %v2535
    %v2576 = vunpack.c.l.b16 %v2536
    %v2577 = vunpack.c.l.b16 %v2537
    %v2578 = vunpack.c.l.b16 %v2538
    %v2579 = vunpack.c.l.b16 %v2539
    %v2580 = vunpack.c.l.b16 %v2540
    %v2581 = vunpack.c.l.b16 %v2541
    %v2582 = vunpack.c.l.b16 %v2542
    %v2583 = vunpack.c.l.b16 %v2543
    %v2584 = vpack.c.b16 %v2569, %v2568
    %v2585 = vpack.c.b16 %v2571, %v2570
    %v2586 = vpack.c.b16 %v2573, %v2572
    %v2587 = vpack.c.b16 %v2575, %v2574
    %v2588 = vpack.c.b16 %v2577, %v2576
    %v2589 = vpack.c.b16 %v2579, %v2578
    %v2590 = vpack.c.b16 %v2581, %v2580
    %v2591 = vpack.c.b16 %v2583, %v2582
    %2600 = vmatpush.bf16.msra.mxu0 %v2591
    %2601 = vmatpush.bf16.msra.mxu0 %v2590
    %2602 = vmatpush.bf16.msra.mxu0 %v2589
    %2603 = vmatpush.bf16.msra.mxu0 %v2588
    %2604 = vmatpush.bf16.msra.mxu0 %v2587
    %2605 = vmatpush.bf16.msra.mxu0 %v2586
    %2606 = vmatpush.bf16.msra.mxu0 %v2585
    %2607 = vmatpush.bf16.msra.mxu0 %v2584
    %2608 = vmatmul.bf16.gmra.mxu0 %v2544
    %v2609 = vpop.f32.mrf.mxu0
    %v2610 = vadd.f32 0.0, %v2609
    %v2611 = vpop.f32.mrf.mxu0
    %v2612 = vadd.f32 0.0, %v2611
    %2613 = vmatmul.bf16.gmra.mxu0 %v2545
    %v2614 = vpop.f32.mrf.mxu0
    %v2615 = vadd.f32 0.0, %v2614
    %v2616 = vpop.f32.mrf.mxu0
    %v2617 = vadd.f32 0.0, %v2616
    %2618 = vmatmul.bf16.gmra.mxu0 %v2546
    %v2619 = vpop.f32.mrf.mxu0
    %v2620 = vadd.f32 0.0, %v2619
    %v2621 = vpop.f32.mrf.mxu0
    %v2622 = vadd.f32 0.0, %v2621
    %2623 = vmatmul.bf16.gmra.mxu0 %v2547
    %v2624 = vpop.f32.mrf.mxu0
    %v2625 = vadd.f32 0.0, %v2624
    %v2626 = vpop.f32.mrf.mxu0
    %v2627 = vadd.f32 0.0, %v2626
    %2628 = vmatmul.bf16.gmra.mxu0 %v2548
    %v2629 = vpop.f32.mrf.mxu0
    %v2630 = vadd.f32 0.0, %v2629
    %v2631 = vpop.f32.mrf.mxu0
    %v2632 = vadd.f32 0.0, %v2631
    %2633 = vmatmul.bf16.gmra.mxu0 %v2549
    %v2634 = vpop.f32.mrf.mxu0
    %v2635 = vadd.f32 0.0, %v2634
    %v2636 = vpop.f32.mrf.mxu0
    %v2637 = vadd.f32 0.0, %v2636
    %2638 = vmatmul.bf16.gmra.mxu0 %v2550
    %v2639 = vpop.f32.mrf.mxu0
    %v2640 = vadd.f32 0.0, %v2639
    %v2641 = vpop.f32.mrf.mxu0
    %v2642 = vadd.f32 0.0, %v2641
    %2643 = vmatmul.bf16.gmra.mxu0 %v2551
    %v2644 = vpop.f32.mrf.mxu0
    %v2645 = vadd.f32 0.0, %v2644
    %v2646 = vpop.f32.mrf.mxu0
    %v2647 = vadd.f32 0.0, %v2646
    %2648 = vdwg.mxu0
    %2665 = vrot.lane.b32.xlu0 %v2610, 64
    %v2666 = vpop.permute.xlu0 %2665
    %2667 = vrot.lane.b32.xlu0 %v2612, 64
    %v2668 = vpop.permute.xlu0 %2667
    %2669 = vrot.lane.b32.xlu0 %v2615, 64
    %v2670 = vpop.permute.xlu0 %2669
    %2671 = vrot.lane.b32.xlu0 %v2617, 64
    %v2672 = vpop.permute.xlu0 %2671
    %2673 = vrot.lane.b32.xlu0 %v2620, 64
    %v2674 = vpop.permute.xlu0 %2673
    %2675 = vrot.lane.b32.xlu0 %v2622, 64
    %v2676 = vpop.permute.xlu0 %2675
    %2677 = vrot.lane.b32.xlu0 %v2625, 64
    %v2678 = vpop.permute.xlu0 %2677
    %2679 = vrot.lane.b32.xlu0 %v2627, 64
    %v2680 = vpop.permute.xlu0 %2679
    %2681 = vrot.lane.b32.xlu0 %v2630, 64
    %v2682 = vpop.permute.xlu0 %2681
    %2683 = vrot.lane.b32.xlu0 %v2632, 64
    %v2684 = vpop.permute.xlu0 %2683
    %2685 = vrot.lane.b32.xlu0 %v2635, 64
    %v2686 = vpop.permute.xlu0 %2685
    %2687 = vrot.lane.b32.xlu0 %v2637, 64
    %v2688 = vpop.permute.xlu0 %2687
    %2689 = vrot.lane.b32.xlu0 %v2640, 64
    %v2690 = vpop.permute.xlu0 %2689
    %2691 = vrot.lane.b32.xlu0 %v2642, 64
    %v2692 = vpop.permute.xlu0 %2691
    %2693 = vrot.lane.b32.xlu0 %v2645, 64
    %v2694 = vpop.permute.xlu0 %2693
    %2695 = vrot.lane.b32.xlu0 %v2647, 64
    %v2696 = vpop.permute.xlu0 %2695
    %v2713 = vadd.f32 %v2261, %v2666
    %v2714 = vadd.f32 %v2262, %v2668
    %v2715 = vadd.f32 %v2263, %v2670
    %v2716 = vadd.f32 %v2264, %v2672
    %v2717 = vadd.f32 %v2265, %v2674
    %v2718 = vadd.f32 %v2266, %v2676
    %v2719 = vadd.f32 %v2267, %v2678
    %v2720 = vadd.f32 %v2268, %v2680
    %v2721 = vadd.f32 %v2269, %v2682
    %v2722 = vadd.f32 %v2270, %v2684
    %v2723 = vadd.f32 %v2271, %v2686
    %v2724 = vadd.f32 %v2272, %v2688
    %v2725 = vadd.f32 %v2273, %v2690
    %v2726 = vadd.f32 %v2274, %v2692
    %v2727 = vadd.f32 %v2275, %v2694
    %v2728 = vadd.f32 %v2276, %v2696
    %v2729 = vld [vmem:[%s2 + $0x4] sm:$0x1]
    %v2730 = vperm.slane %v2729, 0
    %2732 = vrot.lane.b32.xlu0 %v2730, 64
    %v2733 = vpop.permute.xlu0 %2732
    %v2735 = vadd.f32 %v2713, %v2733
    %v2736 = vadd.f32 %v2714, %v2733
    %v2737 = vadd.f32 %v2715, %v2733
    %v2738 = vadd.f32 %v2716, %v2733
    %v2739 = vadd.f32 %v2717, %v2733
    %v2740 = vadd.f32 %v2718, %v2733
    %v2741 = vadd.f32 %v2719, %v2733
    %v2742 = vadd.f32 %v2720, %v2733
    %v2743 = vadd.f32 %v2721, %v2733
    %v2744 = vadd.f32 %v2722, %v2733
    %v2745 = vadd.f32 %v2723, %v2733
    %v2746 = vadd.f32 %v2724, %v2733
    %v2747 = vadd.f32 %v2725, %v2733
    %v2748 = vadd.f32 %v2726, %v2733
    %v2749 = vadd.f32 %v2727, %v2733
    %v2750 = vadd.f32 %v2728, %v2733
    %v2751 = vsel %vm336, %v254, %v2735
    %v2752 = vsel %vm336, %v255, %v2736
    %v2753 = vsel %vm336, %v256, %v2737
    %v2754 = vsel %vm336, %v257, %v2738
    %v2755 = vsel %vm336, %v258, %v2739
    %v2756 = vsel %vm336, %v259, %v2740
    %v2757 = vsel %vm336, %v260, %v2741
    %v2758 = vsel %vm336, %v261, %v2742
    %v2759 = vsel %vm336, %v262, %v2743
    %v2760 = vsel %vm336, %v263, %v2744
    %v2761 = vsel %vm336, %v264, %v2745
    %v2762 = vsel %vm336, %v265, %v2746
    %v2763 = vsel %vm336, %v266, %v2747
    %v2764 = vsel %vm336, %v267, %v2748
    %v2765 = vsel %vm336, %v268, %v2749
    %v2766 = vsel %vm336, %v269, %v2750
    %v2767 = vld [vmem:[%s1 + $0xe0] sm:$0xf]
    %v2768 = vld [vmem:[%s1 + $0xe4] sm:$0xf]
    %v2769 = vld [vmem:[%s1 + $0xe8] sm:$0xf]
    %v2770 = vld [vmem:[%s1 + $0xec] sm:$0xf]
    %v2771 = vld [vmem:[%s1 + $0xf0] sm:$0xf]
    %v2772 = vld [vmem:[%s1 + $0xf4] sm:$0xf]
    %v2773 = vld [vmem:[%s1 + $0xf8] sm:$0xf]
    %v2774 = vld [vmem:[%s1 + $0xfc] sm:$0xf]
    %v2775 = vld [vmem:[%s1 + $0x100] sm:$0xf]
    %v2776 = vld [vmem:[%s1 + $0x104] sm:$0xf]
    %v2777 = vld [vmem:[%s1 + $0x108] sm:$0xf]
    %v2778 = vld [vmem:[%s1 + $0x10c] sm:$0xf]
    %v2779 = vld [vmem:[%s1 + $0x110] sm:$0xf]
    %v2780 = vld [vmem:[%s1 + $0x114] sm:$0xf]
    %v2781 = vld [vmem:[%s1 + $0x118] sm:$0xf]
    %v2782 = vld [vmem:[%s1 + $0x11c] sm:$0xf]
    %v2783 = vpack.c.bf16 %v2752, %v2751
    %v2784 = vpack.c.bf16 %v2754, %v2753
    %v2785 = vpack.c.bf16 %v2756, %v2755
    %v2786 = vpack.c.bf16 %v2758, %v2757
    %v2787 = vpack.c.bf16 %v2760, %v2759
    %v2788 = vpack.c.bf16 %v2762, %v2761
    %v2789 = vpack.c.bf16 %v2764, %v2763
    %v2790 = vpack.c.bf16 %v2766, %v2765
    %v2791 = vld [vmem:[%s2 + $0x5] sm:$0x1]
    %v2792 = vperm.slane %v2791, 0
    %v2809 = vunpack.c.l.b16 %v2767
    %v2810 = vunpack.c.l.b16 %v2768
    %v2811 = vunpack.c.l.b16 %v2769
    %v2812 = vunpack.c.l.b16 %v2770
    %v2813 = vunpack.c.l.b16 %v2771
    %v2814 = vunpack.c.l.b16 %v2772
    %v2815 = vunpack.c.l.b16 %v2773
    %v2816 = vunpack.c.l.b16 %v2774
    %v2817 = vunpack.c.l.b16 %v2775
    %v2818 = vunpack.c.l.b16 %v2776
    %v2819 = vunpack.c.l.b16 %v2777
    %v2820 = vunpack.c.l.b16 %v2778
    %v2821 = vunpack.c.l.b16 %v2779
    %v2822 = vunpack.c.l.b16 %v2780
    %v2823 = vunpack.c.l.b16 %v2781
    %v2824 = vunpack.c.l.b16 %v2782
    %v2825 = vpack.c.b16 %v2810, %v2809
    %v2826 = vpack.c.b16 %v2812, %v2811
    %v2827 = vpack.c.b16 %v2814, %v2813
    %v2828 = vpack.c.b16 %v2816, %v2815
    %v2829 = vpack.c.b16 %v2818, %v2817
    %v2830 = vpack.c.b16 %v2820, %v2819
    %v2831 = vpack.c.b16 %v2822, %v2821
    %v2832 = vpack.c.b16 %v2824, %v2823
    %2841 = vmatpush.bf16.msra.mxu0 %v2832
    %2842 = vmatpush.bf16.msra.mxu0 %v2831
    %2843 = vmatpush.bf16.msra.mxu0 %v2830
    %2844 = vmatpush.bf16.msra.mxu0 %v2829
    %2845 = vmatpush.bf16.msra.mxu0 %v2828
    %2846 = vmatpush.bf16.msra.mxu0 %v2827
    %2847 = vmatpush.bf16.msra.mxu0 %v2826
    %2848 = vmatpush.bf16.msra.mxu0 %v2825
    %2849 = vmatmul.bf16.gmra.mxu0 %v2783
    %v2850 = vpop.f32.mrf.mxu0
    %v2851 = vadd.f32 %v2792, %v2850
    %v2852 = vpop.f32.mrf.mxu0
    %v2853 = vadd.f32 %v2792, %v2852
    %2854 = vmatmul.bf16.gmra.mxu0 %v2784
    %v2855 = vpop.f32.mrf.mxu0
    %v2856 = vadd.f32 %v2792, %v2855
    %v2857 = vpop.f32.mrf.mxu0
    %v2858 = vadd.f32 %v2792, %v2857
    %2859 = vmatmul.bf16.gmra.mxu0 %v2785
    %v2860 = vpop.f32.mrf.mxu0
    %v2861 = vadd.f32 %v2792, %v2860
    %v2862 = vpop.f32.mrf.mxu0
    %v2863 = vadd.f32 %v2792, %v2862
    %2864 = vmatmul.bf16.gmra.mxu0 %v2786
    %v2865 = vpop.f32.mrf.mxu0
    %v2866 = vadd.f32 %v2792, %v2865
    %v2867 = vpop.f32.mrf.mxu0
    %v2868 = vadd.f32 %v2792, %v2867
    %2869 = vmatmul.bf16.gmra.mxu0 %v2787
    %v2870 = vpop.f32.mrf.mxu0
    %v2871 = vadd.f32 %v2792, %v2870
    %v2872 = vpop.f32.mrf.mxu0
    %v2873 = vadd.f32 %v2792, %v2872
    %2874 = vmatmul.bf16.gmra.mxu0 %v2788
    %v2875 = vpop.f32.mrf.mxu0
    %v2876 = vadd.f32 %v2792, %v2875
    %v2877 = vpop.f32.mrf.mxu0
    %v2878 = vadd.f32 %v2792, %v2877
    %2879 = vmatmul.bf16.gmra.mxu0 %v2789
    %v2880 = vpop.f32.mrf.mxu0
    %v2881 = vadd.f32 %v2792, %v2880
    %v2882 = vpop.f32.mrf.mxu0
    %v2883 = vadd.f32 %v2792, %v2882
    %2884 = vmatmul.bf16.gmra.mxu0 %v2790
    %v2885 = vpop.f32.mrf.mxu0
    %v2886 = vadd.f32 %v2792, %v2885
    %v2887 = vpop.f32.mrf.mxu0
    %v2888 = vadd.f32 %v2792, %v2887
    %2889 = vdwg.mxu0
    %v2890 = vmax.f32 %v2851, -60.0
    %v2891 = vmax.f32 %v2853, -60.0
    %v2892 = vmax.f32 %v2856, -60.0
    %v2893 = vmax.f32 %v2858, -60.0
    %v2894 = vmax.f32 %v2861, -60.0
    %v2895 = vmax.f32 %v2863, -60.0
    %v2896 = vmax.f32 %v2866, -60.0
    %v2897 = vmax.f32 %v2868, -60.0
    %v2898 = vmax.f32 %v2871, -60.0
    %v2899 = vmax.f32 %v2873, -60.0
    %v2900 = vmax.f32 %v2876, -60.0
    %v2901 = vmax.f32 %v2878, -60.0
    %v2902 = vmax.f32 %v2881, -60.0
    %v2903 = vmax.f32 %v2883, -60.0
    %v2904 = vmax.f32 %v2886, -60.0
    %v2905 = vmax.f32 %v2888, -60.0
    %v2906 = vsub.f32 0.0, %v2890
    %v2907 = vsub.f32 0.0, %v2891
    %v2908 = vsub.f32 0.0, %v2892
    %v2909 = vsub.f32 0.0, %v2893
    %v2910 = vsub.f32 0.0, %v2894
    %v2911 = vsub.f32 0.0, %v2895
    %v2912 = vsub.f32 0.0, %v2896
    %v2913 = vsub.f32 0.0, %v2897
    %v2914 = vsub.f32 0.0, %v2898
    %v2915 = vsub.f32 0.0, %v2899
    %v2916 = vsub.f32 0.0, %v2900
    %v2917 = vsub.f32 0.0, %v2901
    %v2918 = vsub.f32 0.0, %v2902
    %v2919 = vsub.f32 0.0, %v2903
    %v2920 = vsub.f32 0.0, %v2904
    %v2921 = vsub.f32 0.0, %v2905
    %v2922 = vmul.f32 %v2906, 1.442695
    %v2923 = vpow.pop %v2922
    %v2924 = vmul.f32 %v2907, 1.442695
    %v2925 = vpow.pop %v2924
    %v2926 = vmul.f32 %v2908, 1.442695
    %v2927 = vpow.pop %v2926
    %v2928 = vmul.f32 %v2909, 1.442695
    %v2929 = vpow.pop %v2928
    %v2930 = vmul.f32 %v2910, 1.442695
    %v2931 = vpow.pop %v2930
    %v2932 = vmul.f32 %v2911, 1.442695
    %v2933 = vpow.pop %v2932
    %v2934 = vmul.f32 %v2912, 1.442695
    %v2935 = vpow.pop %v2934
    %v2936 = vmul.f32 %v2913, 1.442695
    %v2937 = vpow.pop %v2936
    %v2938 = vmul.f32 %v2914, 1.442695
    %v2939 = vpow.pop %v2938
    %v2940 = vmul.f32 %v2915, 1.442695
    %v2941 = vpow.pop %v2940
    %v2942 = vmul.f32 %v2916, 1.442695
    %v2943 = vpow.pop %v2942
    %v2944 = vmul.f32 %v2917, 1.442695
    %v2945 = vpow.pop %v2944
    %v2946 = vmul.f32 %v2918, 1.442695
    %v2947 = vpow.pop %v2946
    %v2948 = vmul.f32 %v2919, 1.442695
    %v2949 = vpow.pop %v2948
    %v2950 = vmul.f32 %v2920, 1.442695
    %v2951 = vpow.pop %v2950
    %v2952 = vmul.f32 %v2921, 1.442695
    %v2953 = vpow.pop %v2952
    %v2954 = vadd.f32 %v2923, 1.0
    %v2955 = vadd.f32 %v2925, 1.0
    %v2956 = vadd.f32 %v2927, 1.0
    %v2957 = vadd.f32 %v2929, 1.0
    %v2958 = vadd.f32 %v2931, 1.0
    %v2959 = vadd.f32 %v2933, 1.0
    %v2960 = vadd.f32 %v2935, 1.0
    %v2961 = vadd.f32 %v2937, 1.0
    %v2962 = vadd.f32 %v2939, 1.0
    %v2963 = vadd.f32 %v2941, 1.0
    %v2964 = vadd.f32 %v2943, 1.0
    %v2965 = vadd.f32 %v2945, 1.0
    %v2966 = vadd.f32 %v2947, 1.0
    %v2967 = vadd.f32 %v2949, 1.0
    %v2968 = vadd.f32 %v2951, 1.0
    %v2969 = vadd.f32 %v2953, 1.0
    %v2970 = vrcp.pop %v2954
    %v2971 = vrcp.pop %v2955
    %v2972 = vrcp.pop %v2956
    %v2973 = vrcp.pop %v2957
    %v2974 = vrcp.pop %v2958
    %v2975 = vrcp.pop %v2959
    %v2976 = vrcp.pop %v2960
    %v2977 = vrcp.pop %v2961
    %v2978 = vrcp.pop %v2962
    %v2979 = vrcp.pop %v2963
    %v2980 = vrcp.pop %v2964
    %v2981 = vrcp.pop %v2965
    %v2982 = vrcp.pop %v2966
    %v2983 = vrcp.pop %v2967
    %v2984 = vrcp.pop %v2968
    %v2985 = vrcp.pop %v2969
    %v2986 = vmul.f32 %v2851, %v2970
    %v2987 = vmul.f32 %v2853, %v2971
    %v2988 = vmul.f32 %v2856, %v2972
    %v2989 = vmul.f32 %v2858, %v2973
    %v2990 = vmul.f32 %v2861, %v2974
    %v2991 = vmul.f32 %v2863, %v2975
    %v2992 = vmul.f32 %v2866, %v2976
    %v2993 = vmul.f32 %v2868, %v2977
    %v2994 = vmul.f32 %v2871, %v2978
    %v2995 = vmul.f32 %v2873, %v2979
    %v2996 = vmul.f32 %v2876, %v2980
    %v2997 = vmul.f32 %v2878, %v2981
    %v2998 = vmul.f32 %v2881, %v2982
    %v2999 = vmul.f32 %v2883, %v2983
    %v3000 = vmul.f32 %v2886, %v2984
    %v3001 = vmul.f32 %v2888, %v2985
    %3002 = vst [vmem:[#allocation2] sm:$0xff] %v2986
    %3003 = vst [vmem:[#allocation2 + $0x8] sm:$0xff] %v2987
    %3004 = vst [vmem:[#allocation2 + $0x10] sm:$0xff] %v2988
    %3005 = vst [vmem:[#allocation2 + $0x18] sm:$0xff] %v2989
    %3006 = vst [vmem:[#allocation2 + $0x20] sm:$0xff] %v2990
    %3007 = vst [vmem:[#allocation2 + $0x28] sm:$0xff] %v2991
    %3008 = vst [vmem:[#allocation2 + $0x30] sm:$0xff] %v2992
    %3009 = vst [vmem:[#allocation2 + $0x38] sm:$0xff] %v2993
    %3010 = vst [vmem:[#allocation2 + $0x40] sm:$0xff] %v2994
    %3011 = vst [vmem:[#allocation2 + $0x48] sm:$0xff] %v2995
    %3012 = vst [vmem:[#allocation2 + $0x50] sm:$0xff] %v2996
    %3013 = vst [vmem:[#allocation2 + $0x58] sm:$0xff] %v2997
    %3014 = vst [vmem:[#allocation2 + $0x60] sm:$0xff] %v2998
    %3015 = vst [vmem:[#allocation2 + $0x68] sm:$0xff] %v2999
    %3016 = vst [vmem:[#allocation2 + $0x70] sm:$0xff] %v3000
    %3017 = vst [vmem:[#allocation2 + $0x78] sm:$0xff] %v3001
    // Predicated region
    $region18: #{psa_forward.1} parent=1 // pred_check
      _
    $region19: #{psa_forward.1} parent=1 // pred_check_branch
      %3019 = sbr.rel (0) target = $region21
    $region20: #{psa_forward.1} parent=1 // pred_region
      %3021 = vsyncadd [#allocation3], 0
      %s3022 = sshll.u32 [#allocation2], 4
      %s3023 = int_to_ptr.vmem [resolvable:$true] %s3022
      %s3024 = sshll.u32 %s4, 4
      %s3025 = int_to_ptr.hbm [resolvable:$true] %s3024
      %3030 = dma.vmem_to_hbm [thread:$0]  %s3023, 2048, %s3025, [#allocation3], 128, 128, 8
    $region21: #{psa_forward.1} parent=1 // pred_fallthru
      _
    // Predicated region
    $region22: #{psa_forward.1} parent=1 // pred_check
      _
    $region23: #{psa_forward.1} parent=1 // pred_check_branch
      %3032 = sbr.rel (0) target = $region25
    $region24: #{psa_forward.1} parent=1 // pred_region
      %3034 = dma.done [#allocation3], 2048
    $region25: #{psa_forward.1} parent=1 // pred_fallthru
      _
    %3035 = vsyncpa [#allocation3], 1

</llo_original>
